<compile_context>
chip_gen: v7x
topology: tpu7x:2x2x1
jax: 0.10.0
libtpu: 0.0.40
codegen_flags: <defaults>
</compile_context>

<pallas_src>
import jax
import jax.numpy as jnp
from jax.experimental import pallas as pl
from jax.experimental.pallas import tpu as pltpu

# ---------------- configuration ----------------
NUM_INPUTS = 73          # warehouse observation size
HIDDEN = 64              # hidden_size
GRU_IN = 25              # len(dset)
NUM_ACTIONS = 4          # Discrete(4)
FNN1, FNN2 = 512, 256    # fnn widths
DSET = jnp.array([0] + list(range(49, 73)), dtype=jnp.int32)   # warehouseBase.dset

XPAD = 128               # observation zero-padded to 128 lanes
XIN = XPAD + HIDDEN      # 192: fused kernel input [x_pad | h0]
YBIG = FNN1 + 4 * HIDDEN # 768: [fnn1 | r,z preact | gi_n | gh_n]

# output slab lane layout: [h_new(0:64) | value(64) | action(65) | log_prob(66) | zeros]
SLAB = 128
L_VALUE = HIDDEN
L_ACTION = HIDDEN + 1
L_LOGP = HIDDEN + 2


# ---------------- Pallas kernel ----------------
def iam_kernel(xin_ref, wbig_ref, bbig_ref, w2_ref, b2_ref, w3_ref, b3_ref,
               wht_ref, whb_ref, bhead_ref, out_ref):
    f32 = jnp.float32
    bf16 = jnp.bfloat16
    H = HIDDEN

    xin = xin_ref[...]                       # (T, 192) f32: [obs | 0-pad | hxs*masks]
    h0 = xin[:, XPAD:XPAD + H]               # (T, 64) f32, vreg-aligned slice

    # single fused matmul: fnn layer1 + GRU input proj + GRU hidden proj (r/z summed by MXU)
    y = jnp.dot(xin.astype(bf16), wbig_ref[...],
                preferred_element_type=f32) + bbig_ref[...]                  # (T, 768)

    h1 = jnp.maximum(y[:, :FNN1], 0.0)                                       # (T, 512)
    rz = jax.nn.sigmoid(y[:, FNN1:FNN1 + 2 * H])                             # (T, 128): r|z (biases folded)
    gi_n = y[:, FNN1 + 2 * H:FNN1 + 3 * H]                                   # (T, 64): x_dset@Win + b_in
    gh_n = y[:, FNN1 + 3 * H:]                                               # (T, 64): h0@Whn + b_hn

    # ---- GRU single step (PyTorch gate order r, z, n); elementwise path kept in f32 ----
    r = rz[:, :H]
    z = rz[:, H:]
    n = jnp.tanh(gi_n + r * gh_n)
    h_new = (1.0 - z) * n + z * h0                                           # (T, 64)

    # ---- rest of fnn ----
    h2 = jnp.maximum(jnp.dot(h1.astype(bf16), w2_ref[...],
                             preferred_element_type=f32) + b2_ref[...], 0.0)        # (T, 256)
    fnn_out = jnp.maximum(jnp.dot(h2.astype(bf16), w3_ref[...],
                                  preferred_element_type=f32) + b3_ref[...], 0.0)   # (T, 64)

    # ---- heads: actor∘dist folded + critic, split at the [h_new | fnn_out] boundary ----
    head = (jnp.dot(h_new.astype(bf16), wht_ref[...], preferred_element_type=f32)
            + jnp.dot(fnn_out.astype(bf16), whb_ref[...], preferred_element_type=f32)
            + bhead_ref[...])                                                # (T, 5)
    logits = head[:, :NUM_ACTIONS]
    value = head[:, NUM_ACTIONS:NUM_ACTIONS + 1]

    # ---- FixedCategorical.mode() + log_probs(mode), f32 ----
    lmax = jnp.max(logits, axis=-1, keepdims=True)
    lse = lmax + jnp.log(jnp.sum(jnp.exp(logits - lmax), axis=-1, keepdims=True))
    logp = lmax - lse                                                        # log-prob of argmax action
    idx = jax.lax.broadcasted_iota(jnp.int32, logits.shape, 1).astype(f32)
    action_f = jnp.min(jnp.where(logits == lmax, idx, jnp.float32(NUM_ACTIONS)),
                       axis=-1, keepdims=True)                               # first-max index

    # ---- epilogue: 2 stores total; lanes >= 67 are zero from the packed tile ----
    lane = jax.lax.broadcasted_iota(jnp.int32, (xin.shape[0], H), 1)
    packed = jnp.where(lane == 0, value,
             jnp.where(lane == 1, action_f,
             jnp.where(lane == 2, logp, 0.0)))                               # (T, 64)
    out_ref[:, 0:H] = h_new
    out_ref[:, H:2 * H] = packed


# ---------------- parameters (deterministic init, mirrors module shapes) ----------------
def _orth(key, shape, gain):
    return gain * jax.nn.initializers.orthogonal()(key, shape, jnp.float32)


def init_params(seed=0):
    keys = jax.random.split(jax.random.PRNGKey(seed), 8)
    g = jnp.sqrt(2.0).astype(jnp.float32)
    return dict(
        # fnn: Linear(73,512) ReLU Linear(512,256) ReLU Linear(256,64) ReLU
        w1=_orth(keys[0], (NUM_INPUTS, FNN1), g), b1=jnp.zeros((1, FNN1), jnp.float32),
        w2=_orth(keys[1], (FNN1, FNN2), g),       b2=jnp.zeros((1, FNN2), jnp.float32),
        w3=_orth(keys[2], (FNN2, HIDDEN), g),     b3=jnp.zeros((1, HIDDEN), jnp.float32),
        # GRU(25, 64): orthogonal weights, zero biases (NNBase init); stored as (in, 3H), r|z|n
        wih=_orth(keys[3], (GRU_IN, 3 * HIDDEN), 1.0), bih=jnp.zeros((1, 3 * HIDDEN), jnp.float32),
        whh=_orth(keys[4], (HIDDEN, 3 * HIDDEN), 1.0), bhh=jnp.zeros((1, 3 * HIDDEN), jnp.float32),
        # actor Linear(128,64), critic Linear(128,1), dist Linear(64,4)
        wa=_orth(keys[5], (2 * HIDDEN, HIDDEN), g), ba=jnp.zeros((1, HIDDEN), jnp.float32),
        wc=_orth(keys[6], (2 * HIDDEN, 1), g),      bc=jnp.zeros((1, 1), jnp.float32),
        wd=_orth(keys[7], (HIDDEN, NUM_ACTIONS), 0.01), bd=jnp.zeros((1, NUM_ACTIONS), jnp.float32),
    )


KPARAM_ORDER = ("w_big", "b_big", "w2", "b2", "w3", "b3",
                "w_head_top", "w_head_bot", "b_head")


def prepare_kernel_params(p):
    """One-time host prep: fold/fuse module weights into the kernel layout."""
    bf16 = jnp.bfloat16
    H = HIDDEN
    # GRU input weight scattered to the dset rows of a zero (128, 3H) matrix
    wih_full = jnp.zeros((XPAD, 3 * H), jnp.float32).at[DSET].set(p["wih"])
    # fused (192, 768) weight: rows = [obs(73) | pad(55) | h0(64)],
    # cols = [fnn1(512) | r,z(128): Wih_rz + Whh_rz accumulate | gi_n(64) | gh_n(64)]
    w_big = jnp.zeros((XIN, YBIG), jnp.float32)
    w_big = w_big.at[:NUM_INPUTS, :FNN1].set(p["w1"])
    w_big = w_big.at[:XPAD, FNN1:FNN1 + 2 * H].set(wih_full[:, :2 * H])
    w_big = w_big.at[XPAD:, FNN1:FNN1 + 2 * H].set(p["whh"][:, :2 * H])
    w_big = w_big.at[:XPAD, FNN1 + 2 * H:FNN1 + 3 * H].set(wih_full[:, 2 * H:])
    w_big = w_big.at[XPAD:, FNN1 + 3 * H:].set(p["whh"][:, 2 * H:])
    b_big = jnp.concatenate(
        [p["b1"],
         p["bih"][:, :2 * H] + p["bhh"][:, :2 * H],
         p["bih"][:, 2 * H:],
         p["bhh"][:, 2 * H:]], axis=1)                                   # (1, 768)

    # fold actor Linear + dist Linear (affine∘affine, no nonlinearity), fuse with critic,
    # then split at the h_new/fnn_out boundary so no xcat concat/scratch is needed in-kernel.
    w_logits = p["wa"] @ p["wd"]                                         # (128, 4)
    b_logits = p["ba"] @ p["wd"] + p["bd"]                               # (1, 4)
    w_head = jnp.concatenate([w_logits, p["wc"]], axis=1)                # (128, 5)
    b_head = jnp.concatenate([b_logits, p["bc"]], axis=1)                # (1, 5)
    return dict(
        w_big=w_big.astype(bf16), b_big=b_big,
        w2=p["w2"].astype(bf16), b2=p["b2"],
        w3=p["w3"].astype(bf16), b3=p["b3"],
        w_head_top=w_head[:H].astype(bf16),
        w_head_bot=w_head[H:].astype(bf16),
        b_head=b_head,
    )


# ---------------- wrapper (IAMPolicy.act, deterministic=True) ----------------
@jax.jit
def iam_policy_act(kparams, inputs, rnn_hxs, masks):
    N = inputs.shape[0]
    # tile: aim for >=2 grid steps (v7x has 2 TCs; "parallel" only shards if grid >= 2),
    # allow up to 512 rows/step to amortize per-step grid overhead on large batches.
    half = -(-N // 2)
    tile = min(512, max(8, ((half + 7) // 8) * 8))
    n_pad = ((N + tile - 1) // tile) * tile
    grid = (n_pad // tile,)

    # lane-dense fused block input [obs | zero-pad to 128 | hxs*masks] (layout plumbing)
    xin = jnp.concatenate(
        [inputs, jnp.zeros((N, XPAD - NUM_INPUTS), inputs.dtype), rnn_hxs * masks], axis=1)
    if n_pad != N:
        xin = jnp.pad(xin, ((0, n_pad - N), (0, 0)))   # padded rows sliced off below

    weights = [kparams[k] for k in KPARAM_ORDER]
    in_specs = ([pl.BlockSpec((tile, XIN), lambda i: (i, 0))]
                + [pl.BlockSpec(w.shape, lambda i: (0, 0)) for w in weights])

    flops = 2 * n_pad * (XIN * YBIG + FNN1 * FNN2 + FNN2 * HIDDEN
                         + 2 * HIDDEN * (NUM_ACTIONS + 1))
    transcendentals = n_pad * (3 * HIDDEN + NUM_ACTIONS + 1)
    bytes_accessed = int(sum(w.size * w.dtype.itemsize for w in weights)
                         + 4 * (xin.size + n_pad * SLAB))

    slab = pl.pallas_call(
        iam_kernel,
        out_shape=jax.ShapeDtypeStruct((n_pad, SLAB), jnp.float32),
        grid_spec=pltpu.PrefetchScalarGridSpec(
            num_scalar_prefetch=0,
            grid=grid,
            in_specs=in_specs,
            out_specs=pl.BlockSpec((tile, SLAB), lambda i: (i, 0)),
        ),
        compiler_params=pltpu.CompilerParams(
            dimension_semantics=("parallel",),
            vmem_limit_bytes=32 * 1024 * 1024),
        cost_estimate=pl.CostEstimate(flops=flops, transcendentals=transcendentals,
                                      bytes_accessed=bytes_accessed),
    )(xin, *weights)

    slab = slab[:N]
    hxs_new = slab[:, :HIDDEN]
    value = slab[:, L_VALUE:L_VALUE + 1]
    action = slab[:, L_ACTION:L_ACTION + 1].astype(jnp.int32)
    action_log_probs = slab[:, L_LOGP:L_LOGP + 1]
    # TODO(synk): stochastic dist.sample() and the T*N mask-segmented multi-step GRU path
    # (_forward_gru else-branch, host data-dependent control flow) are not reproduced;
    # only the single-step act(deterministic=True) path is.
    return value, action, action_log_probs, hxs_new


# ---------------- pure-JAX f32 reference (unfused weights) ----------------
def reference_act(p, inputs, rnn_hxs, masks):
    H = HIDDEN
    h0 = rnn_hxs * masks
    gi = inputs[:, DSET] @ p["wih"] + p["bih"]
    gh = h0 @ p["whh"] + p["bhh"]
    r = jax.nn.sigmoid(gi[:, :H] + gh[:, :H])
    z = jax.nn.sigmoid(gi[:, H:2 * H] + gh[:, H:2 * H])
    n = jnp.tanh(gi[:, 2 * H:] + r * gh[:, 2 * H:])
    h_new = (1.0 - z) * n + z * h0
    h1 = jax.nn.relu(inputs @ p["w1"] + p["b1"])
    h2 = jax.nn.relu(h1 @ p["w2"] + p["b2"])
    fnn_out = jax.nn.relu(h2 @ p["w3"] + p["b3"])
    xcat = jnp.concatenate([h_new, fnn_out], axis=1)
    value = xcat @ p["wc"] + p["bc"]
    logits = (xcat @ p["wa"] + p["ba"]) @ p["wd"] + p["bd"]
    logp_all = jax.nn.log_softmax(logits, axis=-1)
    action = jnp.argmax(logits, axis=-1, keepdims=True)
    logp = jnp.take_along_axis(logp_all, action, axis=-1)
    return value, action, logp, h_new


# ---------------- main ----------------
if __name__ == "__main__":
    N = 8
    key = jax.random.PRNGKey(0)
    k_obs, k_hxs = jax.random.split(key)
    inputs = jax.random.uniform(k_obs, (N, NUM_INPUTS), jnp.float32)
    rnn_hxs = jax.random.normal(k_hxs, (N, HIDDEN), jnp.float32) * 0.1
    masks = jnp.ones((N, 1), jnp.float32)

    params = init_params(seed=0)
    kparams = prepare_kernel_params(params)

    value, action, action_log_probs, new_hxs = iam_policy_act(kparams, inputs, rnn_hxs, masks)
    jax.block_until_ready((value, action, action_log_probs, new_hxs))

    assert value.shape == (N, 1)
    assert action.shape == (N, 1)
    assert action_log_probs.shape == (N, 1)
    assert new_hxs.shape == (N, HIDDEN)

    # tolerance check vs. f32 reference (kernel matmuls use bf16 operands / f32 accumulate).
    v_ref, a_ref, lp_ref, h_ref = reference_act(params, inputs, rnn_hxs, masks)
    assert bool(jnp.allclose(new_hxs, h_ref, atol=1e-1, rtol=1e-1))
    assert bool(jnp.allclose(value, v_ref, atol=1e-1, rtol=1e-1))
    assert bool(jnp.allclose(action_log_probs, lp_ref, atol=1e-1, rtol=1e-1))
    # argmax action may legitimately differ from the f32 reference at near-ties; not asserted.

    print("KERNEL_OK")
</pallas_src>

<mosaic_0001>
module attributes {stable_mosaic.version = 11 : i64} {
  func.func @iam_kernel(%arg0: i32, %arg1: memref<8x192xf32, #tpu.memory_space<vmem>>, %arg2: memref<192x768xbf16, #tpu.memory_space<vmem>>, %arg3: memref<1x768xf32, #tpu.memory_space<vmem>>, %arg4: memref<512x256xbf16, #tpu.memory_space<vmem>>, %arg5: memref<1x256xf32, #tpu.memory_space<vmem>>, %arg6: memref<256x64xbf16, #tpu.memory_space<vmem>>, %arg7: memref<1x64xf32, #tpu.memory_space<vmem>>, %arg8: memref<64x5xbf16, #tpu.memory_space<vmem>>, %arg9: memref<64x5xbf16, #tpu.memory_space<vmem>>, %arg10: memref<1x5xf32, #tpu.memory_space<vmem>>, %arg11: memref<8x128xf32, #tpu.memory_space<vmem>>) attributes {dimension_semantics = [#tpu.dimension_semantics<parallel>], iteration_bounds = array<i64: 1>, scalar_prefetch = 0 : i64, scratch_operands = 0 : i64, tpu.core_type = #tpu.core_type<tc>, window_params = [{transform_indices = @transform_0, window_bounds = array<i64: 8, 192>}, {pipeline_mode = #tpu.pipeline_mode<synchronous>, transform_indices = @transform_1, window_bounds = array<i64: 192, 768>}, {pipeline_mode = #tpu.pipeline_mode<synchronous>, transform_indices = @transform_2, window_bounds = array<i64: 1, 768>}, {pipeline_mode = #tpu.pipeline_mode<synchronous>, transform_indices = @transform_3, window_bounds = array<i64: 512, 256>}, {pipeline_mode = #tpu.pipeline_mode<synchronous>, transform_indices = @transform_4, window_bounds = array<i64: 1, 256>}, {pipeline_mode = #tpu.pipeline_mode<synchronous>, transform_indices = @transform_5, window_bounds = array<i64: 256, 64>}, {pipeline_mode = #tpu.pipeline_mode<synchronous>, transform_indices = @transform_6, window_bounds = array<i64: 1, 64>}, {pipeline_mode = #tpu.pipeline_mode<synchronous>, transform_indices = @transform_7, window_bounds = array<i64: 64, 5>}, {pipeline_mode = #tpu.pipeline_mode<synchronous>, transform_indices = @transform_8, window_bounds = array<i64: 64, 5>}, {pipeline_mode = #tpu.pipeline_mode<synchronous>, transform_indices = @transform_9, window_bounds = array<i64: 1, 5>}, {transform_indices = @transform_10, window_bounds = array<i64: 8, 128>}]} {
    %c0 = arith.constant 0 : index
    %c0_0 = arith.constant 0 : index
    %0 = vector.load %arg1[%c0, %c0_0] : memref<8x192xf32, #tpu.memory_space<vmem>>, vector<8x192xf32>
    %1 = vector.extract_strided_slice %0 {offsets = [0, 128], sizes = [8, 64], strides = [1, 1]} : vector<8x192xf32> to vector<8x64xf32>
    %2 = arith.truncf %0 : vector<8x192xf32> to vector<8x192xbf16>
    %c0_1 = arith.constant 0 : index
    %c0_2 = arith.constant 0 : index
    %3 = vector.load %arg2[%c0_1, %c0_2] : memref<192x768xbf16, #tpu.memory_space<vmem>>, vector<192x768xbf16>
    %cst = arith.constant dense<0.000000e+00> : vector<8x768xf32>
    %4 = tpu.matmul %2, %3, %cst {dimension_numbers = #tpu.dot_dimension_numbers<[1], [0], [0], [1], [0, 0, 1, 1], [], []>} : vector<8x192xbf16>, vector<192x768xbf16>, vector<8x768xf32> -> vector<8x768xf32>
    %c0_3 = arith.constant 0 : index
    %c0_4 = arith.constant 0 : index
    %5 = vector.load %arg3[%c0_3, %c0_4] : memref<1x768xf32, #tpu.memory_space<vmem>>, vector<1x768xf32>
    %6 = vector.broadcast %5 : vector<1x768xf32> to vector<8x768xf32>
    %7 = arith.addf %4, %6 : vector<8x768xf32>
    %8 = vector.extract_strided_slice %7 {offsets = [0, 0], sizes = [8, 512], strides = [1, 1]} : vector<8x768xf32> to vector<8x512xf32>
    %cst_5 = arith.constant 0.000000e+00 : f32
    %9 = vector.broadcast %cst_5 : f32 to vector<8x512xf32>
    %10 = arith.maximumf %8, %9 : vector<8x512xf32>
    %11 = vector.extract_strided_slice %7 {offsets = [0, 512], sizes = [8, 128], strides = [1, 1]} : vector<8x768xf32> to vector<8x128xf32>
    %12 = arith.negf %11 : vector<8x128xf32>
    %13 = math.exp %12 : vector<8x128xf32>
    %cst_6 = arith.constant 1.000000e+00 : f32
    %14 = vector.broadcast %cst_6 : f32 to vector<8x128xf32>
    %15 = arith.addf %14, %13 : vector<8x128xf32>
    %16 = arith.divf %14, %15 : vector<8x128xf32>
    %17 = vector.extract_strided_slice %7 {offsets = [0, 640], sizes = [8, 64], strides = [1, 1]} : vector<8x768xf32> to vector<8x64xf32>
    %18 = vector.extract_strided_slice %7 {offsets = [0, 704], sizes = [8, 64], strides = [1, 1]} : vector<8x768xf32> to vector<8x64xf32>
    %19 = vector.extract_strided_slice %16 {offsets = [0, 0], sizes = [8, 64], strides = [1, 1]} : vector<8x128xf32> to vector<8x64xf32>
    %20 = vector.extract_strided_slice %16 {offsets = [0, 64], sizes = [8, 64], strides = [1, 1]} : vector<8x128xf32> to vector<8x64xf32>
    %21 = arith.mulf %19, %18 : vector<8x64xf32>
    %22 = arith.addf %17, %21 : vector<8x64xf32>
    %23 = math.tanh %22 : vector<8x64xf32>
    %cst_7 = arith.constant 1.000000e+00 : f32
    %24 = vector.broadcast %cst_7 : f32 to vector<8x64xf32>
    %25 = arith.subf %24, %20 : vector<8x64xf32>
    %26 = arith.mulf %25, %23 : vector<8x64xf32>
    %27 = arith.mulf %20, %1 : vector<8x64xf32>
    %28 = arith.addf %26, %27 : vector<8x64xf32>
    %29 = arith.truncf %10 : vector<8x512xf32> to vector<8x512xbf16>
    %c0_8 = arith.constant 0 : index
    %c0_9 = arith.constant 0 : index
    %30 = vector.load %arg4[%c0_8, %c0_9] : memref<512x256xbf16, #tpu.memory_space<vmem>>, vector<512x256xbf16>
    %cst_10 = arith.constant dense<0.000000e+00> : vector<8x256xf32>
    %31 = tpu.matmul %29, %30, %cst_10 {dimension_numbers = #tpu.dot_dimension_numbers<[1], [0], [0], [1], [0, 0, 1, 1], [], []>} : vector<8x512xbf16>, vector<512x256xbf16>, vector<8x256xf32> -> vector<8x256xf32>
    %c0_11 = arith.constant 0 : index
    %c0_12 = arith.constant 0 : index
    %32 = vector.load %arg5[%c0_11, %c0_12] : memref<1x256xf32, #tpu.memory_space<vmem>>, vector<1x256xf32>
    %33 = vector.broadcast %32 : vector<1x256xf32> to vector<8x256xf32>
    %34 = arith.addf %31, %33 : vector<8x256xf32>
    %cst_13 = arith.constant 0.000000e+00 : f32
    %35 = vector.broadcast %cst_13 : f32 to vector<8x256xf32>
    %36 = arith.maximumf %34, %35 : vector<8x256xf32>
    %37 = arith.truncf %36 : vector<8x256xf32> to vector<8x256xbf16>
    %c0_14 = arith.constant 0 : index
    %c0_15 = arith.constant 0 : index
    %38 = vector.load %arg6[%c0_14, %c0_15] : memref<256x64xbf16, #tpu.memory_space<vmem>>, vector<256x64xbf16>
    %cst_16 = arith.constant dense<0.000000e+00> : vector<8x64xf32>
    %39 = tpu.matmul %37, %38, %cst_16 {dimension_numbers = #tpu.dot_dimension_numbers<[1], [0], [0], [1], [0, 0, 1, 1], [], []>} : vector<8x256xbf16>, vector<256x64xbf16>, vector<8x64xf32> -> vector<8x64xf32>
    %c0_17 = arith.constant 0 : index
    %c0_18 = arith.constant 0 : index
    %40 = vector.load %arg7[%c0_17, %c0_18] : memref<1x64xf32, #tpu.memory_space<vmem>>, vector<1x64xf32>
    %41 = vector.broadcast %40 : vector<1x64xf32> to vector<8x64xf32>
    %42 = arith.addf %39, %41 : vector<8x64xf32>
    %cst_19 = arith.constant 0.000000e+00 : f32
    %43 = vector.broadcast %cst_19 : f32 to vector<8x64xf32>
    %44 = arith.maximumf %42, %43 : vector<8x64xf32>
    %45 = arith.truncf %28 : vector<8x64xf32> to vector<8x64xbf16>
    %c0_20 = arith.constant 0 : index
    %c0_21 = arith.constant 0 : index
    %46 = vector.load %arg8[%c0_20, %c0_21] : memref<64x5xbf16, #tpu.memory_space<vmem>>, vector<64x5xbf16>
    %cst_22 = arith.constant dense<0.000000e+00> : vector<8x5xf32>
    %47 = tpu.matmul %45, %46, %cst_22 {dimension_numbers = #tpu.dot_dimension_numbers<[1], [0], [0], [1], [0, 0, 1, 1], [], []>} : vector<8x64xbf16>, vector<64x5xbf16>, vector<8x5xf32> -> vector<8x5xf32>
    %48 = arith.truncf %44 : vector<8x64xf32> to vector<8x64xbf16>
    %c0_23 = arith.constant 0 : index
    %c0_24 = arith.constant 0 : index
    %49 = vector.load %arg9[%c0_23, %c0_24] : memref<64x5xbf16, #tpu.memory_space<vmem>>, vector<64x5xbf16>
    %cst_25 = arith.constant dense<0.000000e+00> : vector<8x5xf32>
    %50 = tpu.matmul %48, %49, %cst_25 {dimension_numbers = #tpu.dot_dimension_numbers<[1], [0], [0], [1], [0, 0, 1, 1], [], []>} : vector<8x64xbf16>, vector<64x5xbf16>, vector<8x5xf32> -> vector<8x5xf32>
    %51 = arith.addf %47, %50 : vector<8x5xf32>
    %c0_26 = arith.constant 0 : index
    %c0_27 = arith.constant 0 : index
    %52 = vector.load %arg10[%c0_26, %c0_27] : memref<1x5xf32, #tpu.memory_space<vmem>>, vector<1x5xf32>
    %53 = vector.broadcast %52 : vector<1x5xf32> to vector<8x5xf32>
    %54 = arith.addf %51, %53 : vector<8x5xf32>
    %55 = vector.extract_strided_slice %54 {offsets = [0, 0], sizes = [8, 4], strides = [1, 1]} : vector<8x5xf32> to vector<8x4xf32>
    %56 = vector.extract_strided_slice %54 {offsets = [0, 4], sizes = [8, 1], strides = [1, 1]} : vector<8x5xf32> to vector<8x1xf32>
    %cst_28 = arith.constant dense<0xFF800000> : vector<8xf32>
    %57 = vector.multi_reduction <maximumf>, %55, %cst_28 [1] : vector<8x4xf32> to vector<8xf32>
    %58 = vector.shape_cast %57 : vector<8xf32> to vector<8x1xf32>
    %59 = vector.broadcast %58 : vector<8x1xf32> to vector<8x4xf32>
    %60 = arith.subf %55, %59 : vector<8x4xf32>
    %61 = math.exp %60 : vector<8x4xf32>
    %cst_29 = arith.constant dense<0.000000e+00> : vector<8xf32>
    %62 = vector.multi_reduction <add>, %61, %cst_29 [1] : vector<8x4xf32> to vector<8xf32>
    %63 = vector.shape_cast %62 : vector<8xf32> to vector<8x1xf32>
    %64 = math.log %63 : vector<8x1xf32>
    %65 = arith.addf %58, %64 : vector<8x1xf32>
    %66 = arith.subf %58, %65 : vector<8x1xf32>
    %67 = tpu.iota {dimensions = array<i32: 1>} : vector<8x4xi32>
    %68 = arith.sitofp %67 : vector<8x4xi32> to vector<8x4xf32>
    %69 = vector.broadcast %58 : vector<8x1xf32> to vector<8x4xf32>
    %70 = arith.cmpf oeq, %55, %69 : vector<8x4xf32>
    %cst_30 = arith.constant 4.000000e+00 : f32
    %71 = vector.broadcast %cst_30 : f32 to vector<8x4xf32>
    %72 = arith.select %70, %68, %71 : vector<8x4xi1>, vector<8x4xf32>
    %cst_31 = arith.constant dense<0x7F800000> : vector<8xf32>
    %73 = vector.multi_reduction <minimumf>, %72, %cst_31 [1] : vector<8x4xf32> to vector<8xf32>
    %74 = vector.shape_cast %73 : vector<8xf32> to vector<8x1xf32>
    %75 = tpu.iota {dimensions = array<i32: 1>} : vector<8x64xi32>
    %c0_i32 = arith.constant 0 : i32
    %76 = vector.broadcast %c0_i32 : i32 to vector<8x64xi32>
    %77 = arith.cmpi eq, %75, %76 : vector<8x64xi32>
    %c1_i32 = arith.constant 1 : i32
    %78 = vector.broadcast %c1_i32 : i32 to vector<8x64xi32>
    %79 = arith.cmpi eq, %75, %78 : vector<8x64xi32>
    %c2_i32 = arith.constant 2 : i32
    %80 = vector.broadcast %c2_i32 : i32 to vector<8x64xi32>
    %81 = arith.cmpi eq, %75, %80 : vector<8x64xi32>
    %cst_32 = arith.constant 0.000000e+00 : f32
    %82 = vector.shape_cast %66 : vector<8x1xf32> to vector<8x1xf32>
    %83 = vector.broadcast %82 : vector<8x1xf32> to vector<8x64xf32>
    %84 = vector.broadcast %cst_32 : f32 to vector<8x64xf32>
    %85 = arith.select %81, %83, %84 : vector<8x64xi1>, vector<8x64xf32>
    %86 = vector.shape_cast %74 : vector<8x1xf32> to vector<8x1xf32>
    %87 = vector.broadcast %86 : vector<8x1xf32> to vector<8x64xf32>
    %88 = arith.select %79, %87, %85 : vector<8x64xi1>, vector<8x64xf32>
    %89 = vector.shape_cast %56 : vector<8x1xf32> to vector<8x1xf32>
    %90 = vector.broadcast %89 : vector<8x1xf32> to vector<8x64xf32>
    %91 = arith.select %77, %90, %88 : vector<8x64xi1>, vector<8x64xf32>
    %c0_33 = arith.constant 0 : index
    %c0_34 = arith.constant 0 : index
    %92 = vector.load %arg11[%c0_33, %c0_34] : memref<8x128xf32, #tpu.memory_space<vmem>>, vector<8x64xf32>
    tpu.vector_store %arg11[%c0_33, %c0_34], %28 {strides = array<i32>} : memref<8x128xf32, #tpu.memory_space<vmem>>, vector<8x64xf32>,
    %c0_35 = arith.constant 0 : index
    %c64 = arith.constant 64 : index
    %93 = vector.load %arg11[%c0_35, %c64] : memref<8x128xf32, #tpu.memory_space<vmem>>, vector<8x64xf32>
    tpu.vector_store %arg11[%c0_35, %c64], %91 {strides = array<i32>} : memref<8x128xf32, #tpu.memory_space<vmem>>, vector<8x64xf32>,
    return
  }
  func.func @transform_0(%arg0: i32) -> (i32, i32) {
    %c0_i32 = arith.constant 0 : i32
    %c0_i32_0 = arith.constant 0 : i32
    return %arg0, %c0_i32 : i32, i32
  }
  func.func @transform_1(%arg0: i32) -> (i32, i32) {
    %c0_i32 = arith.constant 0 : i32
    %c0_i32_0 = arith.constant 0 : i32
    %c0_i32_1 = arith.constant 0 : i32
    return %c0_i32, %c0_i32_0 : i32, i32
  }
  func.func @transform_2(%arg0: i32) -> (i32, i32) {
    %c0_i32 = arith.constant 0 : i32
    %c0_i32_0 = arith.constant 0 : i32
    %c0_i32_1 = arith.constant 0 : i32
    return %c0_i32, %c0_i32_0 : i32, i32
  }
  func.func @transform_3(%arg0: i32) -> (i32, i32) {
    %c0_i32 = arith.constant 0 : i32
    %c0_i32_0 = arith.constant 0 : i32
    %c0_i32_1 = arith.constant 0 : i32
    return %c0_i32, %c0_i32_0 : i32, i32
  }
  func.func @transform_4(%arg0: i32) -> (i32, i32) {
    %c0_i32 = arith.constant 0 : i32
    %c0_i32_0 = arith.constant 0 : i32
    %c0_i32_1 = arith.constant 0 : i32
    return %c0_i32, %c0_i32_0 : i32, i32
  }
  func.func @transform_5(%arg0: i32) -> (i32, i32) {
    %c0_i32 = arith.constant 0 : i32
    %c0_i32_0 = arith.constant 0 : i32
    %c0_i32_1 = arith.constant 0 : i32
    return %c0_i32, %c0_i32_0 : i32, i32
  }
  func.func @transform_6(%arg0: i32) -> (i32, i32) {
    %c0_i32 = arith.constant 0 : i32
    %c0_i32_0 = arith.constant 0 : i32
    %c0_i32_1 = arith.constant 0 : i32
    return %c0_i32, %c0_i32_0 : i32, i32
  }
  func.func @transform_7(%arg0: i32) -> (i32, i32) {
    %c0_i32 = arith.constant 0 : i32
    %c0_i32_0 = arith.constant 0 : i32
    %c0_i32_1 = arith.constant 0 : i32
    return %c0_i32, %c0_i32_0 : i32, i32
  }
  func.func @transform_8(%arg0: i32) -> (i32, i32) {
    %c0_i32 = arith.constant 0 : i32
    %c0_i32_0 = arith.constant 0 : i32
    %c0_i32_1 = arith.constant 0 : i32
    return %c0_i32, %c0_i32_0 : i32, i32
  }
  func.func @transform_9(%arg0: i32) -> (i32, i32) {
    %c0_i32 = arith.constant 0 : i32
    %c0_i32_0 = arith.constant 0 : i32
    %c0_i32_1 = arith.constant 0 : i32
    return %c0_i32, %c0_i32_0 : i32, i32
  }
  func.func @transform_10(%arg0: i32) -> (i32, i32) {
    %c0_i32 = arith.constant 0 : i32
    %c0_i32_0 = arith.constant 0 : i32
    return %arg0, %c0_i32 : i32, i32
  }
}

</mosaic_0001>

<llo_original>
// kernel: iam_policy_act.1
$region0: #{iam_policy_act.1}
  #allocation0 [shape = 'u32[]', space=smem, size = 0x4, offset = 0x4, fixed_abs, tag = 'smem constant byte address 0x4 - core index']
  #allocation1 [shape = 'u32[144,128]{1,0:T(1,128)}', space=vmem, size = 0x12000, scoped, tag = 'internal scratch']
  %s0 = inlined_call_operand.vmem [shape: f32[8,192], index: 0, kind: input, shape index: {}]
  %s1 = inlined_call_operand.hbm [shape: bf16[192,768], index: 1, kind: input, shape index: {}]
  %s2 = inlined_call_operand.vmem [shape: f32[1,768], index: 2, kind: input, shape index: {}]
  %s3 = inlined_call_operand.hbm [shape: bf16[512,256], index: 3, kind: input, shape index: {}]
  %s4 = inlined_call_operand.vmem [shape: f32[1,256], index: 4, kind: input, shape index: {}]
  %s5 = inlined_call_operand.vmem [shape: bf16[256,64], index: 5, kind: input, shape index: {}]
  %s6 = inlined_call_operand.vmem [shape: f32[1,64], index: 6, kind: input, shape index: {}]
  %s7 = inlined_call_operand.vmem [shape: bf16[64,5], index: 7, kind: input, shape index: {}]
  %s8 = inlined_call_operand.vmem [shape: bf16[64,5], index: 8, kind: input, shape index: {}]
  %s9 = inlined_call_operand.vmem [shape: f32[1,5], index: 9, kind: input, shape index: {}]
  %s10 = inlined_call_operand.vmem [shape: f32[8,128], index: 10, kind: output, shape index: {}]
  %s11 = sld [smem:[#allocation0]]
  $region58: #{iam_policy_act.1} parent=0
    _
  %s13 = ssub.s32 1, %s11
  %s14 = scalar_select 0, %s13, %s11
  $region1: #{iam_policy_act.1} parent=0
    #allocation2 [shape = 'u8[294912]{0}', space=vmem, size = 0x48000, scoped, tag = 'input window, operand 1, single buffered']
    #allocation3 [shape = 's32[1]{0}', space=sflag, size = 0x4, scoped, tag = 'scoped memory for iam_policy_act.1']
    #allocation4 [shape = 'u8[262144]{0}', space=vmem, size = 0x40000, scoped, tag = 'input window, operand 3, single buffered']
    #allocation5 [shape = 's32[1]{0}', space=sflag, size = 0x4, scoped, tag = 'scoped memory for iam_policy_act.1']
    %15 = vsyncpa [#allocation3], 0
    %16 = vsyncpa [#allocation5], 0
    // Predicated region
    $region2: #{iam_policy_act.1} parent=1 // pred_check
      _
    $region3: #{iam_policy_act.1} parent=1 // pred_check_branch
      %18 = sbr.rel (0) target = $region5
    $region4: #{iam_policy_act.1} parent=1 // pred_region
      _
    $region5: #{iam_policy_act.1} parent=1 // pred_fallthru
      _
    // Predicated region
    $region6: #{iam_policy_act.1} parent=1 // pred_check
      _
    $region7: #{iam_policy_act.1} parent=1 // pred_check_branch
      %20 = sbr.rel (0) target = $region9
    $region8: #{iam_policy_act.1} parent=1 // pred_region
      %s22 = ssub.s32 9216, 9216
      %23 = vsyncadd [#allocation3], %s22
      %s24 = sshll.u32 [#allocation2], 4
      %s25 = int_to_ptr.vmem [resolvable:$true] %s24
      %30 = dma.hbm_to_vmem [thread:$0]  %s1, 9216, %s25, [#allocation3], 384, 384, 24
    $region9: #{iam_policy_act.1} parent=1 // pred_fallthru
      _
    // Predicated region
    $region10: #{iam_policy_act.1} parent=1 // pred_check
      _
    $region11: #{iam_policy_act.1} parent=1 // pred_check_branch
      %32 = sbr.rel (0) target = $region13
    $region12: #{iam_policy_act.1} parent=1 // pred_region
      _
    $region13: #{iam_policy_act.1} parent=1 // pred_fallthru
      _
    // Predicated region
    $region14: #{iam_policy_act.1} parent=1 // pred_check
      _
    $region15: #{iam_policy_act.1} parent=1 // pred_check_branch
      %34 = sbr.rel (0) target = $region17
    $region16: #{iam_policy_act.1} parent=1 // pred_region
      %s36 = ssub.s32 8192, 8192
      %37 = vsyncadd [#allocation5], %s36
      %s38 = sshll.u32 [#allocation4], 4
      %s39 = int_to_ptr.vmem [resolvable:$true] %s38
      %44 = dma.hbm_to_vmem [thread:$0]  %s3, 8192, %s39, [#allocation5], 128, 128, 8
    $region17: #{iam_policy_act.1} parent=1 // pred_fallthru
      _
    // Predicated region
    $region18: #{iam_policy_act.1} parent=1 // pred_check
      _
    $region19: #{iam_policy_act.1} parent=1 // pred_check_branch
      %46 = sbr.rel (0) target = $region21
    $region20: #{iam_policy_act.1} parent=1 // pred_region
      _
    $region21: #{iam_policy_act.1} parent=1 // pred_fallthru
      _
    // Predicated region
    $region22: #{iam_policy_act.1} parent=1 // pred_check
      _
    $region23: #{iam_policy_act.1} parent=1 // pred_check_branch
      %48 = sbr.rel (0) target = $region25
    $region24: #{iam_policy_act.1} parent=1 // pred_region
      _
    $region25: #{iam_policy_act.1} parent=1 // pred_fallthru
      _
    // Predicated region
    $region26: #{iam_policy_act.1} parent=1 // pred_check
      _
    $region27: #{iam_policy_act.1} parent=1 // pred_check_branch
      %50 = sbr.rel (0) target = $region29
    $region28: #{iam_policy_act.1} parent=1 // pred_region
      _
    $region29: #{iam_policy_act.1} parent=1 // pred_fallthru
      _
    // Predicated region
    $region30: #{iam_policy_act.1} parent=1 // pred_check
      _
    $region31: #{iam_policy_act.1} parent=1 // pred_check_branch
      %52 = sbr.rel (0) target = $region33
    $region32: #{iam_policy_act.1} parent=1 // pred_region
      _
    $region33: #{iam_policy_act.1} parent=1 // pred_fallthru
      _
    // Predicated region
    $region34: #{iam_policy_act.1} parent=1 // pred_check
      _
    $region35: #{iam_policy_act.1} parent=1 // pred_check_branch
      %54 = sbr.rel (0) target = $region37
    $region36: #{iam_policy_act.1} parent=1 // pred_region
      _
    $region37: #{iam_policy_act.1} parent=1 // pred_fallthru
      _
    // Predicated region
    $region38: #{iam_policy_act.1} parent=1 // pred_check
      _
    $region39: #{iam_policy_act.1} parent=1 // pred_check_branch
      %56 = sbr.rel (0) target = $region41
    $region40: #{iam_policy_act.1} parent=1 // pred_region
      _
    $region41: #{iam_policy_act.1} parent=1 // pred_fallthru
      _
    // Predicated region
    $region42: #{iam_policy_act.1} parent=1 // pred_check
      _
    $region43: #{iam_policy_act.1} parent=1 // pred_check_branch
      %58 = sbr.rel (0) target = $region45
    $region44: #{iam_policy_act.1} parent=1 // pred_region
      %59 = dma.done [#allocation3], 9216
    $region45: #{iam_policy_act.1} parent=1 // pred_fallthru
      _
    // Predicated region
    $region46: #{iam_policy_act.1} parent=1 // pred_check
      _
    $region47: #{iam_policy_act.1} parent=1 // pred_check_branch
      %61 = sbr.rel (0) target = $region49
    $region48: #{iam_policy_act.1} parent=1 // pred_region
      %62 = dma.done [#allocation5], 8192
    $region49: #{iam_policy_act.1} parent=1 // pred_fallthru
      _
    %v64 = vld [vmem:[%s0] sm:$0xff]
    %v65 = vld [vmem:[%s0 + $0x8] sm:$0xff]
    %v66 = vpack.c.bf16 %v64, %v64
    %v67 = vpack.c.bf16 %v65, %v65
    %v68 = vld [vmem:[#allocation2] sm:$0xff]
    %v69 = vld [vmem:[#allocation2 + $0x8] sm:$0xff]
    %v70 = vld [vmem:[#allocation2 + $0x10] sm:$0xff]
    %v71 = vld [vmem:[#allocation2 + $0x18] sm:$0xff]
    %v72 = vld [vmem:[#allocation2 + $0x20] sm:$0xff]
    %v73 = vld [vmem:[#allocation2 + $0x28] sm:$0xff]
    %v74 = vld [vmem:[#allocation2 + $0x30] sm:$0xff]
    %v75 = vld [vmem:[#allocation2 + $0x38] sm:$0xff]
    %v76 = vld [vmem:[#allocation2 + $0x40] sm:$0xff]
    %v77 = vld [vmem:[#allocation2 + $0x48] sm:$0xff]
    %v78 = vld [vmem:[#allocation2 + $0x50] sm:$0xff]
    %v79 = vld [vmem:[#allocation2 + $0x58] sm:$0xff]
    %v80 = vld [vmem:[#allocation2 + $0x60] sm:$0xff]
    %v81 = vld [vmem:[#allocation2 + $0x68] sm:$0xff]
    %v82 = vld [vmem:[#allocation2 + $0x70] sm:$0xff]
    %v83 = vld [vmem:[#allocation2 + $0x78] sm:$0xff]
    %v84 = vld [vmem:[#allocation2 + $0x80] sm:$0xff]
    %v85 = vld [vmem:[#allocation2 + $0x88] sm:$0xff]
    %v86 = vld [vmem:[#allocation2 + $0x90] sm:$0xff]
    %v87 = vld [vmem:[#allocation2 + $0x98] sm:$0xff]
    %v88 = vld [vmem:[#allocation2 + $0xa0] sm:$0xff]
    %v89 = vld [vmem:[#allocation2 + $0xa8] sm:$0xff]
    %v90 = vld [vmem:[#allocation2 + $0xb0] sm:$0xff]
    %v91 = vld [vmem:[#allocation2 + $0xb8] sm:$0xff]
    %v92 = vld [vmem:[#allocation2 + $0xc0] sm:$0xff]
    %v93 = vld [vmem:[#allocation2 + $0xc8] sm:$0xff]
    %v94 = vld [vmem:[#allocation2 + $0xd0] sm:$0xff]
    %v95 = vld [vmem:[#allocation2 + $0xd8] sm:$0xff]
    %v96 = vld [vmem:[#allocation2 + $0xe0] sm:$0xff]
    %v97 = vld [vmem:[#allocation2 + $0xe8] sm:$0xff]
    %v98 = vld [vmem:[#allocation2 + $0xf0] sm:$0xff]
    %v99 = vld [vmem:[#allocation2 + $0xf8] sm:$0xff]
    %v100 = vld [vmem:[#allocation2 + $0x100] sm:$0xff]
    %v101 = vld [vmem:[#allocation2 + $0x108] sm:$0xff]
    %v102 = vld [vmem:[#allocation2 + $0x110] sm:$0xff]
    %v103 = vld [vmem:[#allocation2 + $0x118] sm:$0xff]
    %v104 = vld [vmem:[#allocation2 + $0x120] sm:$0xff]
    %v105 = vld [vmem:[#allocation2 + $0x128] sm:$0xff]
    %v106 = vld [vmem:[#allocation2 + $0x130] sm:$0xff]
    %v107 = vld [vmem:[#allocation2 + $0x138] sm:$0xff]
    %v108 = vld [vmem:[#allocation2 + $0x140] sm:$0xff]
    %v109 = vld [vmem:[#allocation2 + $0x148] sm:$0xff]
    %v110 = vld [vmem:[#allocation2 + $0x150] sm:$0xff]
    %v111 = vld [vmem:[#allocation2 + $0x158] sm:$0xff]
    %v112 = vld [vmem:[#allocation2 + $0x160] sm:$0xff]
    %v113 = vld [vmem:[#allocation2 + $0x168] sm:$0xff]
    %v114 = vld [vmem:[#allocation2 + $0x170] sm:$0xff]
    %v115 = vld [vmem:[#allocation2 + $0x178] sm:$0xff]
    %v116 = vld [vmem:[#allocation2 + $0x180] sm:$0xff]
    %v117 = vld [vmem:[#allocation2 + $0x188] sm:$0xff]
    %v118 = vld [vmem:[#allocation2 + $0x190] sm:$0xff]
    %v119 = vld [vmem:[#allocation2 + $0x198] sm:$0xff]
    %v120 = vld [vmem:[#allocation2 + $0x1a0] sm:$0xff]
    %v121 = vld [vmem:[#allocation2 + $0x1a8] sm:$0xff]
    %v122 = vld [vmem:[#allocation2 + $0x1b0] sm:$0xff]
    %v123 = vld [vmem:[#allocation2 + $0x1b8] sm:$0xff]
    %v124 = vld [vmem:[#allocation2 + $0x1c0] sm:$0xff]
    %v125 = vld [vmem:[#allocation2 + $0x1c8] sm:$0xff]
    %v126 = vld [vmem:[#allocation2 + $0x1d0] sm:$0xff]
    %v127 = vld [vmem:[#allocation2 + $0x1d8] sm:$0xff]
    %v128 = vld [vmem:[#allocation2 + $0x1e0] sm:$0xff]
    %v129 = vld [vmem:[#allocation2 + $0x1e8] sm:$0xff]
    %v130 = vld [vmem:[#allocation2 + $0x1f0] sm:$0xff]
    %v131 = vld [vmem:[#allocation2 + $0x1f8] sm:$0xff]
    %v132 = vld [vmem:[#allocation2 + $0x200] sm:$0xff]
    %v133 = vld [vmem:[#allocation2 + $0x208] sm:$0xff]
    %v134 = vld [vmem:[#allocation2 + $0x210] sm:$0xff]
    %v135 = vld [vmem:[#allocation2 + $0x218] sm:$0xff]
    %v136 = vld [vmem:[#allocation2 + $0x220] sm:$0xff]
    %v137 = vld [vmem:[#allocation2 + $0x228] sm:$0xff]
    %v138 = vld [vmem:[#allocation2 + $0x230] sm:$0xff]
    %v139 = vld [vmem:[#allocation2 + $0x238] sm:$0xff]
    %v140 = vld [vmem:[%s2] sm:$0x3f]
    %v142 = vlaneseq
    %v143 = vshrl.u32 %v142, 7
    %v144 = vsub.s32 0, %v143
    %v145 = vrot.slane %v140, %v144
    %v146 = vlaneseq
    %v147 = vshrl.u32 %v146, 7
    %v148 = vsub.s32 1, %v147
    %v149 = vrot.slane %v140, %v148
    %v150 = vlaneseq
    %v151 = vshrl.u32 %v150, 7
    %v152 = vsub.s32 2, %v151
    %v153 = vrot.slane %v140, %v152
    %v154 = vlaneseq
    %v155 = vshrl.u32 %v154, 7
    %v156 = vsub.s32 3, %v155
    %v157 = vrot.slane %v140, %v156
    %v158 = vlaneseq
    %v159 = vshrl.u32 %v158, 7
    %v160 = vsub.s32 4, %v159
    %v161 = vrot.slane %v140, %v160
    %v162 = vlaneseq
    %v163 = vshrl.u32 %v162, 7
    %v164 = vsub.s32 5, %v163
    %v165 = vrot.slane %v140, %v164
    %v244 = vunpack.c.l.b16 %v68
    %v245 = vunpack.c.h.b16 %v68
    %v246 = vunpack.c.l.b16 %v69
    %v247 = vunpack.c.h.b16 %v69
    %v248 = vunpack.c.l.b16 %v70
    %v249 = vunpack.c.h.b16 %v70
    %v250 = vunpack.c.l.b16 %v71
    %v251 = vunpack.c.h.b16 %v71
    %v252 = vunpack.c.l.b16 %v72
    %v253 = vunpack.c.h.b16 %v72
    %v254 = vunpack.c.l.b16 %v73
    %v255 = vunpack.c.h.b16 %v73
    %v256 = vunpack.c.l.b16 %v74
    %v257 = vunpack.c.h.b16 %v74
    %v258 = vunpack.c.l.b16 %v75
    %v259 = vunpack.c.h.b16 %v75
    %v260 = vunpack.c.l.b16 %v76
    %v261 = vunpack.c.h.b16 %v76
    %v262 = vunpack.c.l.b16 %v77
    %v263 = vunpack.c.h.b16 %v77
    %v264 = vunpack.c.l.b16 %v78
    %v265 = vunpack.c.h.b16 %v78
    %v266 = vunpack.c.l.b16 %v79
    %v267 = vunpack.c.h.b16 %v79
    %v268 = vunpack.c.l.b16 %v80
    %v269 = vunpack.c.h.b16 %v80
    %v270 = vunpack.c.l.b16 %v81
    %v271 = vunpack.c.h.b16 %v81
    %v272 = vunpack.c.l.b16 %v82
    %v273 = vunpack.c.h.b16 %v82
    %v274 = vunpack.c.l.b16 %v83
    %v275 = vunpack.c.h.b16 %v83
    %v276 = vunpack.c.l.b16 %v84
    %v277 = vunpack.c.h.b16 %v84
    %v278 = vunpack.c.l.b16 %v85
    %v279 = vunpack.c.h.b16 %v85
    %v280 = vunpack.c.l.b16 %v86
    %v281 = vunpack.c.h.b16 %v86
    %v282 = vunpack.c.l.b16 %v87
    %v283 = vunpack.c.h.b16 %v87
    %v284 = vunpack.c.l.b16 %v88
    %v285 = vunpack.c.h.b16 %v88
    %v286 = vunpack.c.l.b16 %v89
    %v287 = vunpack.c.h.b16 %v89
    %v288 = vunpack.c.l.b16 %v90
    %v289 = vunpack.c.h.b16 %v90
    %v290 = vunpack.c.l.b16 %v91
    %v291 = vunpack.c.h.b16 %v91
    %v292 = vunpack.c.l.b16 %v92
    %v293 = vunpack.c.h.b16 %v92
    %v294 = vunpack.c.l.b16 %v93
    %v295 = vunpack.c.h.b16 %v93
    %v296 = vunpack.c.l.b16 %v94
    %v297 = vunpack.c.h.b16 %v94
    %v298 = vunpack.c.l.b16 %v95
    %v299 = vunpack.c.h.b16 %v95
    %v300 = vunpack.c.l.b16 %v96
    %v301 = vunpack.c.h.b16 %v96
    %v302 = vunpack.c.l.b16 %v97
    %v303 = vunpack.c.h.b16 %v97
    %v304 = vunpack.c.l.b16 %v98
    %v305 = vunpack.c.h.b16 %v98
    %v306 = vunpack.c.l.b16 %v99
    %v307 = vunpack.c.h.b16 %v99
    %v308 = vunpack.c.l.b16 %v100
    %v309 = vunpack.c.h.b16 %v100
    %v310 = vunpack.c.l.b16 %v101
    %v311 = vunpack.c.h.b16 %v101
    %v312 = vunpack.c.l.b16 %v102
    %v313 = vunpack.c.h.b16 %v102
    %v314 = vunpack.c.l.b16 %v103
    %v315 = vunpack.c.h.b16 %v103
    %v316 = vunpack.c.l.b16 %v104
    %v317 = vunpack.c.h.b16 %v104
    %v318 = vunpack.c.l.b16 %v105
    %v319 = vunpack.c.h.b16 %v105
    %v320 = vunpack.c.l.b16 %v106
    %v321 = vunpack.c.h.b16 %v106
    %v322 = vunpack.c.l.b16 %v107
    %v323 = vunpack.c.h.b16 %v107
    %v324 = vunpack.c.l.b16 %v108
    %v325 = vunpack.c.h.b16 %v108
    %v326 = vunpack.c.l.b16 %v109
    %v327 = vunpack.c.h.b16 %v109
    %v328 = vunpack.c.l.b16 %v110
    %v329 = vunpack.c.h.b16 %v110
    %v330 = vunpack.c.l.b16 %v111
    %v331 = vunpack.c.h.b16 %v111
    %v332 = vunpack.c.l.b16 %v112
    %v333 = vunpack.c.h.b16 %v112
    %v334 = vunpack.c.l.b16 %v113
    %v335 = vunpack.c.h.b16 %v113
    %v336 = vunpack.c.l.b16 %v114
    %v337 = vunpack.c.h.b16 %v114
    %v338 = vunpack.c.l.b16 %v115
    %v339 = vunpack.c.h.b16 %v115
    %v340 = vunpack.c.l.b16 %v116
    %v341 = vunpack.c.h.b16 %v116
    %v342 = vunpack.c.l.b16 %v117
    %v343 = vunpack.c.h.b16 %v117
    %v344 = vunpack.c.l.b16 %v118
    %v345 = vunpack.c.h.b16 %v118
    %v346 = vunpack.c.l.b16 %v119
    %v347 = vunpack.c.h.b16 %v119
    %v348 = vunpack.c.l.b16 %v120
    %v349 = vunpack.c.h.b16 %v120
    %v350 = vunpack.c.l.b16 %v121
    %v351 = vunpack.c.h.b16 %v121
    %v352 = vunpack.c.l.b16 %v122
    %v353 = vunpack.c.h.b16 %v122
    %v354 = vunpack.c.l.b16 %v123
    %v355 = vunpack.c.h.b16 %v123
    %v356 = vunpack.c.l.b16 %v124
    %v357 = vunpack.c.h.b16 %v124
    %v358 = vunpack.c.l.b16 %v125
    %v359 = vunpack.c.h.b16 %v125
    %v360 = vunpack.c.l.b16 %v126
    %v361 = vunpack.c.h.b16 %v126
    %v362 = vunpack.c.l.b16 %v127
    %v363 = vunpack.c.h.b16 %v127
    %v364 = vunpack.c.l.b16 %v128
    %v365 = vunpack.c.h.b16 %v128
    %v366 = vunpack.c.l.b16 %v129
    %v367 = vunpack.c.h.b16 %v129
    %v368 = vunpack.c.l.b16 %v130
    %v369 = vunpack.c.h.b16 %v130
    %v370 = vunpack.c.l.b16 %v131
    %v371 = vunpack.c.h.b16 %v131
    %v372 = vunpack.c.l.b16 %v132
    %v373 = vunpack.c.h.b16 %v132
    %v374 = vunpack.c.l.b16 %v133
    %v375 = vunpack.c.h.b16 %v133
    %v376 = vunpack.c.l.b16 %v134
    %v377 = vunpack.c.h.b16 %v134
    %v378 = vunpack.c.l.b16 %v135
    %v379 = vunpack.c.h.b16 %v135
    %v380 = vunpack.c.l.b16 %v136
    %v381 = vunpack.c.h.b16 %v136
    %v382 = vunpack.c.l.b16 %v137
    %v383 = vunpack.c.h.b16 %v137
    %v384 = vunpack.c.l.b16 %v138
    %v385 = vunpack.c.h.b16 %v138
    %v386 = vunpack.c.l.b16 %v139
    %v387 = vunpack.c.h.b16 %v139
    %v388 = vpack.c.b16 %v250, %v244
    %v389 = vpack.c.b16 %v251, %v245
    %v390 = vpack.c.b16 %v252, %v246
    %v391 = vpack.c.b16 %v253, %v247
    %v392 = vpack.c.b16 %v254, %v248
    %v393 = vpack.c.b16 %v255, %v249
    %v394 = vpack.c.b16 %v262, %v256
    %v395 = vpack.c.b16 %v263, %v257
    %v396 = vpack.c.b16 %v264, %v258
    %v397 = vpack.c.b16 %v265, %v259
    %v398 = vpack.c.b16 %v266, %v260
    %v399 = vpack.c.b16 %v267, %v261
    %v400 = vpack.c.b16 %v274, %v268
    %v401 = vpack.c.b16 %v275, %v269
    %v402 = vpack.c.b16 %v276, %v270
    %v403 = vpack.c.b16 %v277, %v271
    %v404 = vpack.c.b16 %v278, %v272
    %v405 = vpack.c.b16 %v279, %v273
    %v406 = vpack.c.b16 %v286, %v280
    %v407 = vpack.c.b16 %v287, %v281
    %v408 = vpack.c.b16 %v288, %v282
    %v409 = vpack.c.b16 %v289, %v283
    %v410 = vpack.c.b16 %v290, %v284
    %v411 = vpack.c.b16 %v291, %v285
    %v412 = vpack.c.b16 %v298, %v292
    %v413 = vpack.c.b16 %v299, %v293
    %v414 = vpack.c.b16 %v300, %v294
    %v415 = vpack.c.b16 %v301, %v295
    %v416 = vpack.c.b16 %v302, %v296
    %v417 = vpack.c.b16 %v303, %v297
    %v418 = vpack.c.b16 %v310, %v304
    %v419 = vpack.c.b16 %v311, %v305
    %v420 = vpack.c.b16 %v312, %v306
    %v421 = vpack.c.b16 %v313, %v307
    %v422 = vpack.c.b16 %v314, %v308
    %v423 = vpack.c.b16 %v315, %v309
    %v424 = vpack.c.b16 %v322, %v316
    %v425 = vpack.c.b16 %v323, %v317
    %v426 = vpack.c.b16 %v324, %v318
    %v427 = vpack.c.b16 %v325, %v319
    %v428 = vpack.c.b16 %v326, %v320
    %v429 = vpack.c.b16 %v327, %v321
    %v430 = vpack.c.b16 %v334, %v328
    %v431 = vpack.c.b16 %v335, %v329
    %v432 = vpack.c.b16 %v336, %v330
    %v433 = vpack.c.b16 %v337, %v331
    %v434 = vpack.c.b16 %v338, %v332
    %v435 = vpack.c.b16 %v339, %v333
    %v436 = vpack.c.b16 %v346, %v340
    %v437 = vpack.c.b16 %v347, %v341
    %v438 = vpack.c.b16 %v348, %v342
    %v439 = vpack.c.b16 %v349, %v343
    %v440 = vpack.c.b16 %v350, %v344
    %v441 = vpack.c.b16 %v351, %v345
    %v442 = vpack.c.b16 %v358, %v352
    %v443 = vpack.c.b16 %v359, %v353
    %v444 = vpack.c.b16 %v360, %v354
    %v445 = vpack.c.b16 %v361, %v355
    %v446 = vpack.c.b16 %v362, %v356
    %v447 = vpack.c.b16 %v363, %v357
    %v448 = vpack.c.b16 %v370, %v364
    %v449 = vpack.c.b16 %v371, %v365
    %v450 = vpack.c.b16 %v372, %v366
    %v451 = vpack.c.b16 %v373, %v367
    %v452 = vpack.c.b16 %v374, %v368
    %v453 = vpack.c.b16 %v375, %v369
    %v454 = vpack.c.b16 %v382, %v376
    %v455 = vpack.c.b16 %v383, %v377
    %v456 = vpack.c.b16 %v384, %v378
    %v457 = vpack.c.b16 %v385, %v379
    %v458 = vpack.c.b16 %v386, %v380
    %v459 = vpack.c.b16 %v387, %v381
    %vm532 = vcmask 523264
    %v534 = vsel %vm532, %v67, 0
    %536 = vmatprep.subr.bf16.mxu0 %v389
    %537 = vmatpush1.bf16.msra.mxu0 %v388
    %538 = vmatprep.subr.bf16.mxu0 %v395
    %539 = vmatpush1.bf16.msra.mxu0 %v394
    %540 = vmatprep.subr.bf16.mxu0 %v401
    %541 = vmatpush1.bf16.msra.mxu0 %v400
    %542 = vmatprep.subr.bf16.mxu0 %v407
    %543 = vmatpush1.bf16.msra.mxu0 %v406
    %544 = vmatprep.subr.bf16.mxu0 %v413
    %545 = vmatpush1.bf16.msra.mxu0 %v412
    %546 = vmatprep.subr.bf16.mxu0 %v419
    %547 = vmatpush1.bf16.msra.mxu0 %v418
    %548 = vmatprep.subr.bf16.mxu0 %v425
    %549 = vmatpush1.bf16.msra.mxu0 %v424
    %550 = vmatprep.subr.bf16.mxu0 %v431
    %551 = vmatpush1.bf16.msra.mxu0 %v430
    %552 = vmatprep.subr.bf16.mxu0 %v437
    %553 = vmatpush1.bf16.msra.mxu0 %v436
    %554 = vmatprep.subr.bf16.mxu0 %v443
    %555 = vmatpush1.bf16.msra.mxu0 %v442
    %556 = vmatprep.subr.bf16.mxu0 %v449
    %557 = vmatpush1.bf16.msra.mxu0 %v448
    %558 = vmatprep.subr.bf16.mxu0 %v455
    %559 = vmatpush1.bf16.msra.mxu0 %v454
    %560 = vmatprep.subr.bf16.mxu0 0
    %561 = vmatpush1.bf16.msra.mxu0 0
    %562 = vmatprep.subr.bf16.mxu0 0
    %563 = vmatpush1.bf16.msra.mxu0 0
    %564 = vmatprep.subr.bf16.mxu0 0
    %565 = vmatpush1.bf16.msra.mxu0 0
    %566 = vmatprep.subr.bf16.mxu0 0
    %567 = vmatpush1.bf16.msra.mxu0 0
    %568 = vmatprep.mubr.bf16.mxu0 %v534
    %569 = vmatmul.mubr.bf16.gmra.mrb[0].mxu0 %v66
    %v570 = vpop.f32.mrb[0].mxu0
    %v571 = vadd.f32 %v145, %v570
    %v572 = vpop.f32.mrb[0].mxu0
    %v573 = vadd.f32 %v149, %v572
    %v574 = vpop.f32.mrb[0].mxu0
    %v575 = vpop.f32.mrb[0].mxu0
    %576 = vdwg.mxu0
    %577 = vmatprep.subr.bf16.mxu0 %v391
    %578 = vmatpush1.bf16.msra.mxu0 %v390
    %579 = vmatprep.subr.bf16.mxu0 %v397
    %580 = vmatpush1.bf16.msra.mxu0 %v396
    %581 = vmatprep.subr.bf16.mxu0 %v403
    %582 = vmatpush1.bf16.msra.mxu0 %v402
    %583 = vmatprep.subr.bf16.mxu0 %v409
    %584 = vmatpush1.bf16.msra.mxu0 %v408
    %585 = vmatprep.subr.bf16.mxu0 %v415
    %586 = vmatpush1.bf16.msra.mxu0 %v414
    %587 = vmatprep.subr.bf16.mxu0 %v421
    %588 = vmatpush1.bf16.msra.mxu0 %v420
    %589 = vmatprep.subr.bf16.mxu0 %v427
    %590 = vmatpush1.bf16.msra.mxu0 %v426
    %591 = vmatprep.subr.bf16.mxu0 %v433
    %592 = vmatpush1.bf16.msra.mxu0 %v432
    %593 = vmatprep.subr.bf16.mxu0 %v439
    %594 = vmatpush1.bf16.msra.mxu0 %v438
    %595 = vmatprep.subr.bf16.mxu0 %v445
    %596 = vmatpush1.bf16.msra.mxu0 %v444
    %597 = vmatprep.subr.bf16.mxu0 %v451
    %598 = vmatpush1.bf16.msra.mxu0 %v450
    %599 = vmatprep.subr.bf16.mxu0 %v457
    %600 = vmatpush1.bf16.msra.mxu0 %v456
    %601 = vmatprep.subr.bf16.mxu0 0
    %602 = vmatpush1.bf16.msra.mxu0 0
    %603 = vmatprep.subr.bf16.mxu0 0
    %604 = vmatpush1.bf16.msra.mxu0 0
    %605 = vmatprep.subr.bf16.mxu0 0
    %606 = vmatpush1.bf16.msra.mxu0 0
    %607 = vmatprep.subr.bf16.mxu0 0
    %608 = vmatpush1.bf16.msra.mxu0 0
    %609 = vmatprep.mubr.bf16.mxu0 %v534
    %610 = vmatmul.mubr.bf16.gmra.mrb[0].mxu0 %v66
    %v611 = vpop.f32.mrb[0].mxu0
    %v612 = vadd.f32 %v153, %v611
    %v613 = vpop.f32.mrb[0].mxu0
    %v614 = vadd.f32 %v157, %v613
    %v615 = vpop.f32.mrb[0].mxu0
    %v616 = vpop.f32.mrb[0].mxu0
    %617 = vdwg.mxu0
    %618 = vmatprep.subr.bf16.mxu0 %v393
    %619 = vmatpush1.bf16.msra.mxu0 %v392
    %620 = vmatprep.subr.bf16.mxu0 %v399
    %621 = vmatpush1.bf16.msra.mxu0 %v398
    %622 = vmatprep.subr.bf16.mxu0 %v405
    %623 = vmatpush1.bf16.msra.mxu0 %v404
    %624 = vmatprep.subr.bf16.mxu0 %v411
    %625 = vmatpush1.bf16.msra.mxu0 %v410
    %626 = vmatprep.subr.bf16.mxu0 %v417
    %627 = vmatpush1.bf16.msra.mxu0 %v416
    %628 = vmatprep.subr.bf16.mxu0 %v423
    %629 = vmatpush1.bf16.msra.mxu0 %v422
    %630 = vmatprep.subr.bf16.mxu0 %v429
    %631 = vmatpush1.bf16.msra.mxu0 %v428
    %632 = vmatprep.subr.bf16.mxu0 %v435
    %633 = vmatpush1.bf16.msra.mxu0 %v434
    %634 = vmatprep.subr.bf16.mxu0 %v441
    %635 = vmatpush1.bf16.msra.mxu0 %v440
    %636 = vmatprep.subr.bf16.mxu0 %v447
    %637 = vmatpush1.bf16.msra.mxu0 %v446
    %638 = vmatprep.subr.bf16.mxu0 %v453
    %639 = vmatpush1.bf16.msra.mxu0 %v452
    %640 = vmatprep.subr.bf16.mxu0 %v459
    %641 = vmatpush1.bf16.msra.mxu0 %v458
    %642 = vmatprep.subr.bf16.mxu0 0
    %643 = vmatpush1.bf16.msra.mxu0 0
    %644 = vmatprep.subr.bf16.mxu0 0
    %645 = vmatpush1.bf16.msra.mxu0 0
    %646 = vmatprep.subr.bf16.mxu0 0
    %647 = vmatpush1.bf16.msra.mxu0 0
    %648 = vmatprep.subr.bf16.mxu0 0
    %649 = vmatpush1.bf16.msra.mxu0 0
    %650 = vmatprep.mubr.bf16.mxu0 %v534
    %651 = vmatmul.mubr.bf16.gmra.mrb[0].mxu0 %v66
    %v652 = vpop.f32.mrb[0].mxu0
    %v653 = vadd.f32 %v161, %v652
    %v654 = vpop.f32.mrb[0].mxu0
    %v655 = vadd.f32 %v165, %v654
    %v656 = vpop.f32.mrb[0].mxu0
    %v657 = vpop.f32.mrb[0].mxu0
    %658 = vdwg.mxu0
    %v659 = vmax.f32 %v571, 0.0
    %v660 = vmax.f32 %v573, 0.0
    %v661 = vmax.f32 %v612, 0.0
    %v662 = vmax.f32 %v614, 0.0
    %v663 = vxor.u32 %v653, 2147483648
    %v664 = vmul.f32 %v663, 1.442695
    %v665 = vpow.pop %v664
    %v666 = vadd.f32 %v665, 1.0
    %v667 = vrcp.pop %v666
    %v668 = vmul.f32 1.0, %v667
    %670 = vrot.lane.b32.xlu0 %v655, 64
    %v671 = vpop.permute.xlu0 %670
    %v673 = vmul.f32 %v668, %v671
    %v674 = vadd.f32 %v655, %v673
    %v675 = vtanh.pop %v674
    %v676 = vsub.f32 1.0, %v668
    %678 = vrot.lane.b32.xlu0 %v675, 64
    %v679 = vpop.permute.xlu0 %678
    %v681 = vmul.f32 %v676, %v679
    %683 = vrot.lane.b32.xlu0 %v65, 64
    %v684 = vpop.permute.xlu0 %683
    %v686 = vmul.f32 %v668, %v684
    %v687 = vadd.f32 %v681, %v686
    %v688 = vpack.c.bf16 %v659, %v659
    %v689 = vpack.c.bf16 %v660, %v660
    %v690 = vpack.c.bf16 %v661, %v661
    %v691 = vpack.c.bf16 %v662, %v662
    %v692 = vld [vmem:[#allocation4] sm:$0xff]
    %v693 = vld [vmem:[#allocation4 + $0x8] sm:$0xff]
    %v694 = vld [vmem:[#allocation4 + $0x10] sm:$0xff]
    %v695 = vld [vmem:[#allocation4 + $0x18] sm:$0xff]
    %v696 = vld [vmem:[#allocation4 + $0x20] sm:$0xff]
    %v697 = vld [vmem:[#allocation4 + $0x28] sm:$0xff]
    %v698 = vld [vmem:[#allocation4 + $0x30] sm:$0xff]
    %v699 = vld [vmem:[#allocation4 + $0x38] sm:$0xff]
    %v700 = vld [vmem:[#allocation4 + $0x40] sm:$0xff]
    %v701 = vld [vmem:[#allocation4 + $0x48] sm:$0xff]
    %v702 = vld [vmem:[#allocation4 + $0x50] sm:$0xff]
    %v703 = vld [vmem:[#allocation4 + $0x58] sm:$0xff]
    %v704 = vld [vmem:[#allocation4 + $0x60] sm:$0xff]
    %v705 = vld [vmem:[#allocation4 + $0x68] sm:$0xff]
    %v706 = vld [vmem:[#allocation4 + $0x70] sm:$0xff]
    %v707 = vld [vmem:[#allocation4 + $0x78] sm:$0xff]
    %v708 = vld [vmem:[#allocation4 + $0x80] sm:$0xff]
    %v709 = vld [vmem:[#allocation4 + $0x88] sm:$0xff]
    %v710 = vld [vmem:[#allocation4 + $0x90] sm:$0xff]
    %v711 = vld [vmem:[#allocation4 + $0x98] sm:$0xff]
    %v712 = vld [vmem:[#allocation4 + $0xa0] sm:$0xff]
    %v713 = vld [vmem:[#allocation4 + $0xa8] sm:$0xff]
    %v714 = vld [vmem:[#allocation4 + $0xb0] sm:$0xff]
    %v715 = vld [vmem:[#allocation4 + $0xb8] sm:$0xff]
    %v716 = vld [vmem:[#allocation4 + $0xc0] sm:$0xff]
    %v717 = vld [vmem:[#allocation4 + $0xc8] sm:$0xff]
    %v718 = vld [vmem:[#allocation4 + $0xd0] sm:$0xff]
    %v719 = vld [vmem:[#allocation4 + $0xd8] sm:$0xff]
    %v720 = vld [vmem:[#allocation4 + $0xe0] sm:$0xff]
    %v721 = vld [vmem:[#allocation4 + $0xe8] sm:$0xff]
    %v722 = vld [vmem:[#allocation4 + $0xf0] sm:$0xff]
    %v723 = vld [vmem:[#allocation4 + $0xf8] sm:$0xff]
    %v724 = vld [vmem:[#allocation4 + $0x100] sm:$0xff]
    %v725 = vld [vmem:[#allocation4 + $0x108] sm:$0xff]
    %v726 = vld [vmem:[#allocation4 + $0x110] sm:$0xff]
    %v727 = vld [vmem:[#allocation4 + $0x118] sm:$0xff]
    %v728 = vld [vmem:[#allocation4 + $0x120] sm:$0xff]
    %v729 = vld [vmem:[#allocation4 + $0x128] sm:$0xff]
    %v730 = vld [vmem:[#allocation4 + $0x130] sm:$0xff]
    %v731 = vld [vmem:[#allocation4 + $0x138] sm:$0xff]
    %v732 = vld [vmem:[#allocation4 + $0x140] sm:$0xff]
    %v733 = vld [vmem:[#allocation4 + $0x148] sm:$0xff]
    %v734 = vld [vmem:[#allocation4 + $0x150] sm:$0xff]
    %v735 = vld [vmem:[#allocation4 + $0x158] sm:$0xff]
    %v736 = vld [vmem:[#allocation4 + $0x160] sm:$0xff]
    %v737 = vld [vmem:[#allocation4 + $0x168] sm:$0xff]
    %v738 = vld [vmem:[#allocation4 + $0x170] sm:$0xff]
    %v739 = vld [vmem:[#allocation4 + $0x178] sm:$0xff]
    %v740 = vld [vmem:[#allocation4 + $0x180] sm:$0xff]
    %v741 = vld [vmem:[#allocation4 + $0x188] sm:$0xff]
    %v742 = vld [vmem:[#allocation4 + $0x190] sm:$0xff]
    %v743 = vld [vmem:[#allocation4 + $0x198] sm:$0xff]
    %v744 = vld [vmem:[#allocation4 + $0x1a0] sm:$0xff]
    %v745 = vld [vmem:[#allocation4 + $0x1a8] sm:$0xff]
    %v746 = vld [vmem:[#allocation4 + $0x1b0] sm:$0xff]
    %v747 = vld [vmem:[#allocation4 + $0x1b8] sm:$0xff]
    %v748 = vld [vmem:[#allocation4 + $0x1c0] sm:$0xff]
    %v749 = vld [vmem:[#allocation4 + $0x1c8] sm:$0xff]
    %v750 = vld [vmem:[#allocation4 + $0x1d0] sm:$0xff]
    %v751 = vld [vmem:[#allocation4 + $0x1d8] sm:$0xff]
    %v752 = vld [vmem:[#allocation4 + $0x1e0] sm:$0xff]
    %v753 = vld [vmem:[#allocation4 + $0x1e8] sm:$0xff]
    %v754 = vld [vmem:[#allocation4 + $0x1f0] sm:$0xff]
    %v755 = vld [vmem:[#allocation4 + $0x1f8] sm:$0xff]
    %v756 = vld [vmem:[%s4] sm:$0x3]
    %v758 = vlaneseq
    %v759 = vshrl.u32 %v758, 7
    %v760 = vsub.s32 0, %v759
    %v761 = vrot.slane %v756, %v760
    %v762 = vlaneseq
    %v763 = vshrl.u32 %v762, 7
    %v764 = vsub.s32 1, %v763
    %v765 = vrot.slane %v756, %v764
    %v832 = vunpack.c.l.b16 %v692
    %v833 = vunpack.c.h.b16 %v692
    %v834 = vunpack.c.l.b16 %v693
    %v835 = vunpack.c.h.b16 %v693
    %v836 = vunpack.c.l.b16 %v694
    %v837 = vunpack.c.h.b16 %v694
    %v838 = vunpack.c.l.b16 %v695
    %v839 = vunpack.c.h.b16 %v695
    %v840 = vunpack.c.l.b16 %v696
    %v841 = vunpack.c.h.b16 %v696
    %v842 = vunpack.c.l.b16 %v697
    %v843 = vunpack.c.h.b16 %v697
    %v844 = vunpack.c.l.b16 %v698
    %v845 = vunpack.c.h.b16 %v698
    %v846 = vunpack.c.l.b16 %v699
    %v847 = vunpack.c.h.b16 %v699
    %v848 = vunpack.c.l.b16 %v700
    %v849 = vunpack.c.h.b16 %v700
    %v850 = vunpack.c.l.b16 %v701
    %v851 = vunpack.c.h.b16 %v701
    %v852 = vunpack.c.l.b16 %v702
    %v853 = vunpack.c.h.b16 %v702
    %v854 = vunpack.c.l.b16 %v703
    %v855 = vunpack.c.h.b16 %v703
    %v856 = vunpack.c.l.b16 %v704
    %v857 = vunpack.c.h.b16 %v704
    %v858 = vunpack.c.l.b16 %v705
    %v859 = vunpack.c.h.b16 %v705
    %v860 = vunpack.c.l.b16 %v706
    %v861 = vunpack.c.h.b16 %v706
    %v862 = vunpack.c.l.b16 %v707
    %v863 = vunpack.c.h.b16 %v707
    %v864 = vunpack.c.l.b16 %v708
    %v865 = vunpack.c.h.b16 %v708
    %v866 = vunpack.c.l.b16 %v709
    %v867 = vunpack.c.h.b16 %v709
    %v868 = vunpack.c.l.b16 %v710
    %v869 = vunpack.c.h.b16 %v710
    %v870 = vunpack.c.l.b16 %v711
    %v871 = vunpack.c.h.b16 %v711
    %v872 = vunpack.c.l.b16 %v712
    %v873 = vunpack.c.h.b16 %v712
    %v874 = vunpack.c.l.b16 %v713
    %v875 = vunpack.c.h.b16 %v713
    %v876 = vunpack.c.l.b16 %v714
    %v877 = vunpack.c.h.b16 %v714
    %v878 = vunpack.c.l.b16 %v715
    %v879 = vunpack.c.h.b16 %v715
    %v880 = vunpack.c.l.b16 %v716
    %v881 = vunpack.c.h.b16 %v716
    %v882 = vunpack.c.l.b16 %v717
    %v883 = vunpack.c.h.b16 %v717
    %v884 = vunpack.c.l.b16 %v718
    %v885 = vunpack.c.h.b16 %v718
    %v886 = vunpack.c.l.b16 %v719
    %v887 = vunpack.c.h.b16 %v719
    %v888 = vunpack.c.l.b16 %v720
    %v889 = vunpack.c.h.b16 %v720
    %v890 = vunpack.c.l.b16 %v721
    %v891 = vunpack.c.h.b16 %v721
    %v892 = vunpack.c.l.b16 %v722
    %v893 = vunpack.c.h.b16 %v722
    %v894 = vunpack.c.l.b16 %v723
    %v895 = vunpack.c.h.b16 %v723
    %v896 = vunpack.c.l.b16 %v724
    %v897 = vunpack.c.h.b16 %v724
    %v898 = vunpack.c.l.b16 %v725
    %v899 = vunpack.c.h.b16 %v725
    %v900 = vunpack.c.l.b16 %v726
    %v901 = vunpack.c.h.b16 %v726
    %v902 = vunpack.c.l.b16 %v727
    %v903 = vunpack.c.h.b16 %v727
    %v904 = vunpack.c.l.b16 %v728
    %v905 = vunpack.c.h.b16 %v728
    %v906 = vunpack.c.l.b16 %v729
    %v907 = vunpack.c.h.b16 %v729
    %v908 = vunpack.c.l.b16 %v730
    %v909 = vunpack.c.h.b16 %v730
    %v910 = vunpack.c.l.b16 %v731
    %v911 = vunpack.c.h.b16 %v731
    %v912 = vunpack.c.l.b16 %v732
    %v913 = vunpack.c.h.b16 %v732
    %v914 = vunpack.c.l.b16 %v733
    %v915 = vunpack.c.h.b16 %v733
    %v916 = vunpack.c.l.b16 %v734
    %v917 = vunpack.c.h.b16 %v734
    %v918 = vunpack.c.l.b16 %v735
    %v919 = vunpack.c.h.b16 %v735
    %v920 = vunpack.c.l.b16 %v736
    %v921 = vunpack.c.h.b16 %v736
    %v922 = vunpack.c.l.b16 %v737
    %v923 = vunpack.c.h.b16 %v737
    %v924 = vunpack.c.l.b16 %v738
    %v925 = vunpack.c.h.b16 %v738
    %v926 = vunpack.c.l.b16 %v739
    %v927 = vunpack.c.h.b16 %v739
    %v928 = vunpack.c.l.b16 %v740
    %v929 = vunpack.c.h.b16 %v740
    %v930 = vunpack.c.l.b16 %v741
    %v931 = vunpack.c.h.b16 %v741
    %v932 = vunpack.c.l.b16 %v742
    %v933 = vunpack.c.h.b16 %v742
    %v934 = vunpack.c.l.b16 %v743
    %v935 = vunpack.c.h.b16 %v743
    %v936 = vunpack.c.l.b16 %v744
    %v937 = vunpack.c.h.b16 %v744
    %v938 = vunpack.c.l.b16 %v745
    %v939 = vunpack.c.h.b16 %v745
    %v940 = vunpack.c.l.b16 %v746
    %v941 = vunpack.c.h.b16 %v746
    %v942 = vunpack.c.l.b16 %v747
    %v943 = vunpack.c.h.b16 %v747
    %v944 = vunpack.c.l.b16 %v748
    %v945 = vunpack.c.h.b16 %v748
    %v946 = vunpack.c.l.b16 %v749
    %v947 = vunpack.c.h.b16 %v749
    %v948 = vunpack.c.l.b16 %v750
    %v949 = vunpack.c.h.b16 %v750
    %v950 = vunpack.c.l.b16 %v751
    %v951 = vunpack.c.h.b16 %v751
    %v952 = vunpack.c.l.b16 %v752
    %v953 = vunpack.c.h.b16 %v752
    %v954 = vunpack.c.l.b16 %v753
    %v955 = vunpack.c.h.b16 %v753
    %v956 = vunpack.c.l.b16 %v754
    %v957 = vunpack.c.h.b16 %v754
    %v958 = vunpack.c.l.b16 %v755
    %v959 = vunpack.c.h.b16 %v755
    %v960 = vpack.c.b16 %v834, %v832
    %v961 = vpack.c.b16 %v835, %v833
    %v962 = vpack.c.b16 %v838, %v836
    %v963 = vpack.c.b16 %v839, %v837
    %v964 = vpack.c.b16 %v842, %v840
    %v965 = vpack.c.b16 %v843, %v841
    %v966 = vpack.c.b16 %v846, %v844
    %v967 = vpack.c.b16 %v847, %v845
    %v968 = vpack.c.b16 %v850, %v848
    %v969 = vpack.c.b16 %v851, %v849
    %v970 = vpack.c.b16 %v854, %v852
    %v971 = vpack.c.b16 %v855, %v853
    %v972 = vpack.c.b16 %v858, %v856
    %v973 = vpack.c.b16 %v859, %v857
    %v974 = vpack.c.b16 %v862, %v860
    %v975 = vpack.c.b16 %v863, %v861
    %v976 = vpack.c.b16 %v866, %v864
    %v977 = vpack.c.b16 %v867, %v865
    %v978 = vpack.c.b16 %v870, %v868
    %v979 = vpack.c.b16 %v871, %v869
    %v980 = vpack.c.b16 %v874, %v872
    %v981 = vpack.c.b16 %v875, %v873
    %v982 = vpack.c.b16 %v878, %v876
    %v983 = vpack.c.b16 %v879, %v877
    %v984 = vpack.c.b16 %v882, %v880
    %v985 = vpack.c.b16 %v883, %v881
    %v986 = vpack.c.b16 %v886, %v884
    %v987 = vpack.c.b16 %v887, %v885
    %v988 = vpack.c.b16 %v890, %v888
    %v989 = vpack.c.b16 %v891, %v889
    %v990 = vpack.c.b16 %v894, %v892
    %v991 = vpack.c.b16 %v895, %v893
    %v992 = vpack.c.b16 %v898, %v896
    %v993 = vpack.c.b16 %v899, %v897
    %v994 = vpack.c.b16 %v902, %v900
    %v995 = vpack.c.b16 %v903, %v901
    %v996 = vpack.c.b16 %v906, %v904
    %v997 = vpack.c.b16 %v907, %v905
    %v998 = vpack.c.b16 %v910, %v908
    %v999 = vpack.c.b16 %v911, %v909
    %v1000 = vpack.c.b16 %v914, %v912
    %v1001 = vpack.c.b16 %v915, %v913
    %v1002 = vpack.c.b16 %v918, %v916
    %v1003 = vpack.c.b16 %v919, %v917
    %v1004 = vpack.c.b16 %v922, %v920
    %v1005 = vpack.c.b16 %v923, %v921
    %v1006 = vpack.c.b16 %v926, %v924
    %v1007 = vpack.c.b16 %v927, %v925
    %v1008 = vpack.c.b16 %v930, %v928
    %v1009 = vpack.c.b16 %v931, %v929
    %v1010 = vpack.c.b16 %v934, %v932
    %v1011 = vpack.c.b16 %v935, %v933
    %v1012 = vpack.c.b16 %v938, %v936
    %v1013 = vpack.c.b16 %v939, %v937
    %v1014 = vpack.c.b16 %v942, %v940
    %v1015 = vpack.c.b16 %v943, %v941
    %v1016 = vpack.c.b16 %v946, %v944
    %v1017 = vpack.c.b16 %v947, %v945
    %v1018 = vpack.c.b16 %v950, %v948
    %v1019 = vpack.c.b16 %v951, %v949
    %v1020 = vpack.c.b16 %v954, %v952
    %v1021 = vpack.c.b16 %v955, %v953
    %v1022 = vpack.c.b16 %v958, %v956
    %v1023 = vpack.c.b16 %v959, %v957
    %1088 = vmatprep.subr.bf16.mxu0 %v961
    %1089 = vmatpush1.bf16.msra.mxu0 %v960
    %1090 = vmatprep.subr.bf16.mxu0 %v963
    %1091 = vmatpush1.bf16.msra.mxu0 %v962
    %1092 = vmatprep.subr.bf16.mxu0 %v965
    %1093 = vmatpush1.bf16.msra.mxu0 %v964
    %1094 = vmatprep.subr.bf16.mxu0 %v967
    %1095 = vmatpush1.bf16.msra.mxu0 %v966
    %1096 = vmatprep.subr.bf16.mxu0 %v969
    %1097 = vmatpush1.bf16.msra.mxu0 %v968
    %1098 = vmatprep.subr.bf16.mxu0 %v971
    %1099 = vmatpush1.bf16.msra.mxu0 %v970
    %1100 = vmatprep.subr.bf16.mxu0 %v973
    %1101 = vmatpush1.bf16.msra.mxu0 %v972
    %1102 = vmatprep.subr.bf16.mxu0 %v975
    %1103 = vmatpush1.bf16.msra.mxu0 %v974
    %1104 = vmatprep.subr.bf16.mxu0 %v977
    %1105 = vmatpush1.bf16.msra.mxu0 %v976
    %1106 = vmatprep.subr.bf16.mxu0 %v979
    %1107 = vmatpush1.bf16.msra.mxu0 %v978
    %1108 = vmatprep.subr.bf16.mxu0 %v981
    %1109 = vmatpush1.bf16.msra.mxu0 %v980
    %1110 = vmatprep.subr.bf16.mxu0 %v983
    %1111 = vmatpush1.bf16.msra.mxu0 %v982
    %1112 = vmatprep.subr.bf16.mxu0 %v985
    %1113 = vmatpush1.bf16.msra.mxu0 %v984
    %1114 = vmatprep.subr.bf16.mxu0 %v987
    %1115 = vmatpush1.bf16.msra.mxu0 %v986
    %1116 = vmatprep.subr.bf16.mxu0 %v989
    %1117 = vmatpush1.bf16.msra.mxu0 %v988
    %1118 = vmatprep.subr.bf16.mxu0 %v991
    %1119 = vmatpush1.bf16.msra.mxu0 %v990
    %1120 = vmatprep.mubr.bf16.mxu0 %v689
    %1121 = vmatmul.mubr.bf16.gmra.mrb[0].mxu0 %v688
    %v1122 = vpop.f32.mrb[0].mxu0
    %v1123 = vadd.f32 %v761, %v1122
    %v1124 = vpop.f32.mrb[0].mxu0
    %v1125 = vadd.f32 %v765, %v1124
    %v1126 = vpop.f32.mrb[0].mxu0
    %v1127 = vpop.f32.mrb[0].mxu0
    %1128 = vdwg.mxu0
    %1129 = vmatprep.subr.bf16.mxu0 %v993
    %1130 = vmatpush1.bf16.msra.mxu0 %v992
    %1131 = vmatprep.subr.bf16.mxu0 %v995
    %1132 = vmatpush1.bf16.msra.mxu0 %v994
    %1133 = vmatprep.subr.bf16.mxu0 %v997
    %1134 = vmatpush1.bf16.msra.mxu0 %v996
    %1135 = vmatprep.subr.bf16.mxu0 %v999
    %1136 = vmatpush1.bf16.msra.mxu0 %v998
    %1137 = vmatprep.subr.bf16.mxu0 %v1001
    %1138 = vmatpush1.bf16.msra.mxu0 %v1000
    %1139 = vmatprep.subr.bf16.mxu0 %v1003
    %1140 = vmatpush1.bf16.msra.mxu0 %v1002
    %1141 = vmatprep.subr.bf16.mxu0 %v1005
    %1142 = vmatpush1.bf16.msra.mxu0 %v1004
    %1143 = vmatprep.subr.bf16.mxu0 %v1007
    %1144 = vmatpush1.bf16.msra.mxu0 %v1006
    %1145 = vmatprep.subr.bf16.mxu0 %v1009
    %1146 = vmatpush1.bf16.msra.mxu0 %v1008
    %1147 = vmatprep.subr.bf16.mxu0 %v1011
    %1148 = vmatpush1.bf16.msra.mxu0 %v1010
    %1149 = vmatprep.subr.bf16.mxu0 %v1013
    %1150 = vmatpush1.bf16.msra.mxu0 %v1012
    %1151 = vmatprep.subr.bf16.mxu0 %v1015
    %1152 = vmatpush1.bf16.msra.mxu0 %v1014
    %1153 = vmatprep.subr.bf16.mxu0 %v1017
    %1154 = vmatpush1.bf16.msra.mxu0 %v1016
    %1155 = vmatprep.subr.bf16.mxu0 %v1019
    %1156 = vmatpush1.bf16.msra.mxu0 %v1018
    %1157 = vmatprep.subr.bf16.mxu0 %v1021
    %1158 = vmatpush1.bf16.msra.mxu0 %v1020
    %1159 = vmatprep.subr.bf16.mxu0 %v1023
    %1160 = vmatpush1.bf16.msra.mxu0 %v1022
    %1161 = vmatprep.mubr.bf16.mxu0 %v691
    %1162 = vmatmul.mubr.bf16.gmra.mrb[0].mxu0 %v690
    %v1163 = vpop.f32.mrb[0].mxu0
    %v1164 = vadd.f32 %v1123, %v1163
    %v1165 = vpop.f32.mrb[0].mxu0
    %v1166 = vadd.f32 %v1125, %v1165
    %v1167 = vpop.f32.mrb[0].mxu0
    %v1168 = vpop.f32.mrb[0].mxu0
    %1169 = vdwg.mxu0
    %v1170 = vmax.f32 %v1164, 0.0
    %v1171 = vmax.f32 %v1166, 0.0
    %v1172 = vpack.c.bf16 %v1170, %v1170
    %v1173 = vpack.c.bf16 %v1171, %v1171
    %v1174 = vld [vmem:[%s5] sm:$0xf]
    %v1175 = vld [vmem:[%s5 + $0x4] sm:$0xf]
    %v1176 = vld [vmem:[%s5 + $0x8] sm:$0xf]
    %v1177 = vld [vmem:[%s5 + $0xc] sm:$0xf]
    %v1178 = vld [vmem:[%s5 + $0x10] sm:$0xf]
    %v1179 = vld [vmem:[%s5 + $0x14] sm:$0xf]
    %v1180 = vld [vmem:[%s5 + $0x18] sm:$0xf]
    %v1181 = vld [vmem:[%s5 + $0x1c] sm:$0xf]
    %v1182 = vld [vmem:[%s5 + $0x20] sm:$0xf]
    %v1183 = vld [vmem:[%s5 + $0x24] sm:$0xf]
    %v1184 = vld [vmem:[%s5 + $0x28] sm:$0xf]
    %v1185 = vld [vmem:[%s5 + $0x2c] sm:$0xf]
    %v1186 = vld [vmem:[%s5 + $0x30] sm:$0xf]
    %v1187 = vld [vmem:[%s5 + $0x34] sm:$0xf]
    %v1188 = vld [vmem:[%s5 + $0x38] sm:$0xf]
    %v1189 = vld [vmem:[%s5 + $0x3c] sm:$0xf]
    %v1190 = vld [vmem:[%s5 + $0x40] sm:$0xf]
    %v1191 = vld [vmem:[%s5 + $0x44] sm:$0xf]
    %v1192 = vld [vmem:[%s5 + $0x48] sm:$0xf]
    %v1193 = vld [vmem:[%s5 + $0x4c] sm:$0xf]
    %v1194 = vld [vmem:[%s5 + $0x50] sm:$0xf]
    %v1195 = vld [vmem:[%s5 + $0x54] sm:$0xf]
    %v1196 = vld [vmem:[%s5 + $0x58] sm:$0xf]
    %v1197 = vld [vmem:[%s5 + $0x5c] sm:$0xf]
    %v1198 = vld [vmem:[%s5 + $0x60] sm:$0xf]
    %v1199 = vld [vmem:[%s5 + $0x64] sm:$0xf]
    %v1200 = vld [vmem:[%s5 + $0x68] sm:$0xf]
    %v1201 = vld [vmem:[%s5 + $0x6c] sm:$0xf]
    %v1202 = vld [vmem:[%s5 + $0x70] sm:$0xf]
    %v1203 = vld [vmem:[%s5 + $0x74] sm:$0xf]
    %v1204 = vld [vmem:[%s5 + $0x78] sm:$0xf]
    %v1205 = vld [vmem:[%s5 + $0x7c] sm:$0xf]
    %v1206 = vld [vmem:[%s6] sm:$0x1]
    %v1208 = vlaneseq
    %v1209 = vshrl.u32 %v1208, 7
    %v1210 = vsub.s32 0, %v1209
    %v1211 = vrot.slane %v1206, %v1210
    %v1245 = vunpack.c.l.b16 %v1174
    %v1246 = vunpack.c.l.b16 %v1175
    %v1247 = vunpack.c.l.b16 %v1176
    %v1248 = vunpack.c.l.b16 %v1177
    %v1249 = vunpack.c.l.b16 %v1178
    %v1250 = vunpack.c.l.b16 %v1179
    %v1251 = vunpack.c.l.b16 %v1180
    %v1252 = vunpack.c.l.b16 %v1181
    %v1253 = vunpack.c.l.b16 %v1182
    %v1254 = vunpack.c.l.b16 %v1183
    %v1255 = vunpack.c.l.b16 %v1184
    %v1256 = vunpack.c.l.b16 %v1185
    %v1257 = vunpack.c.l.b16 %v1186
    %v1258 = vunpack.c.l.b16 %v1187
    %v1259 = vunpack.c.l.b16 %v1188
    %v1260 = vunpack.c.l.b16 %v1189
    %v1261 = vunpack.c.l.b16 %v1190
    %v1262 = vunpack.c.l.b16 %v1191
    %v1263 = vunpack.c.l.b16 %v1192
    %v1264 = vunpack.c.l.b16 %v1193
    %v1265 = vunpack.c.l.b16 %v1194
    %v1266 = vunpack.c.l.b16 %v1195
    %v1267 = vunpack.c.l.b16 %v1196
    %v1268 = vunpack.c.l.b16 %v1197
    %v1269 = vunpack.c.l.b16 %v1198
    %v1270 = vunpack.c.l.b16 %v1199
    %v1271 = vunpack.c.l.b16 %v1200
    %v1272 = vunpack.c.l.b16 %v1201
    %v1273 = vunpack.c.l.b16 %v1202
    %v1274 = vunpack.c.l.b16 %v1203
    %v1275 = vunpack.c.l.b16 %v1204
    %v1276 = vunpack.c.l.b16 %v1205
    %v1277 = vpack.c.b16 %v1246, %v1245
    %v1278 = vpack.c.b16 %v1248, %v1247
    %v1279 = vpack.c.b16 %v1250, %v1249
    %v1280 = vpack.c.b16 %v1252, %v1251
    %v1281 = vpack.c.b16 %v1254, %v1253
    %v1282 = vpack.c.b16 %v1256, %v1255
    %v1283 = vpack.c.b16 %v1258, %v1257
    %v1284 = vpack.c.b16 %v1260, %v1259
    %v1285 = vpack.c.b16 %v1262, %v1261
    %v1286 = vpack.c.b16 %v1264, %v1263
    %v1287 = vpack.c.b16 %v1266, %v1265
    %v1288 = vpack.c.b16 %v1268, %v1267
    %v1289 = vpack.c.b16 %v1270, %v1269
    %v1290 = vpack.c.b16 %v1272, %v1271
    %v1291 = vpack.c.b16 %v1274, %v1273
    %v1292 = vpack.c.b16 %v1276, %v1275
    %1309 = vmatprep.subr.bf16.mxu0 0
    %1310 = vmatpush1.bf16.msra.mxu0 %v1277
    %1311 = vmatprep.subr.bf16.mxu0 0
    %1312 = vmatpush1.bf16.msra.mxu0 %v1278
    %1313 = vmatprep.subr.bf16.mxu0 0
    %1314 = vmatpush1.bf16.msra.mxu0 %v1279
    %1315 = vmatprep.subr.bf16.mxu0 0
    %1316 = vmatpush1.bf16.msra.mxu0 %v1280
    %1317 = vmatprep.subr.bf16.mxu0 0
    %1318 = vmatpush1.bf16.msra.mxu0 %v1281
    %1319 = vmatprep.subr.bf16.mxu0 0
    %1320 = vmatpush1.bf16.msra.mxu0 %v1282
    %1321 = vmatprep.subr.bf16.mxu0 0
    %1322 = vmatpush1.bf16.msra.mxu0 %v1283
    %1323 = vmatprep.subr.bf16.mxu0 0
    %1324 = vmatpush1.bf16.msra.mxu0 %v1284
    %1325 = vmatprep.subr.bf16.mxu0 0
    %1326 = vmatpush1.bf16.msra.mxu0 %v1285
    %1327 = vmatprep.subr.bf16.mxu0 0
    %1328 = vmatpush1.bf16.msra.mxu0 %v1286
    %1329 = vmatprep.subr.bf16.mxu0 0
    %1330 = vmatpush1.bf16.msra.mxu0 %v1287
    %1331 = vmatprep.subr.bf16.mxu0 0
    %1332 = vmatpush1.bf16.msra.mxu0 %v1288
    %1333 = vmatprep.subr.bf16.mxu0 0
    %1334 = vmatpush1.bf16.msra.mxu0 %v1289
    %1335 = vmatprep.subr.bf16.mxu0 0
    %1336 = vmatpush1.bf16.msra.mxu0 %v1290
    %1337 = vmatprep.subr.bf16.mxu0 0
    %1338 = vmatpush1.bf16.msra.mxu0 %v1291
    %1339 = vmatprep.subr.bf16.mxu0 0
    %1340 = vmatpush1.bf16.msra.mxu0 %v1292
    %1341 = vmatprep.mubr.bf16.mxu0 %v1173
    %1342 = vmatmul.mubr.bf16.gmra.mrb[0].mxu0 %v1172
    %v1343 = vpop.f32.mrb[0].mxu0
    %v1344 = vadd.f32 %v1211, %v1343
    %v1345 = vpop.f32.mrb[0].mxu0
    %v1346 = vpop.f32.mrb[0].mxu0
    %v1347 = vpop.f32.mrb[0].mxu0
    %1348 = vdwg.mxu0
    %v1349 = vmax.f32 %v1344, 0.0
    %v1350 = vpack.c.bf16 %v687, %v687
    %v1351 = vld [vmem:[%s7] sm:$0xf]
    %v1352 = vld [vmem:[%s7 + $0x4] sm:$0xf]
    %v1353 = vld [vmem:[%s7 + $0x8] sm:$0xf]
    %v1354 = vld [vmem:[%s7 + $0xc] sm:$0xf]
    %v1355 = vld [vmem:[%s7 + $0x10] sm:$0xf]
    %v1356 = vld [vmem:[%s7 + $0x14] sm:$0xf]
    %v1357 = vld [vmem:[%s7 + $0x18] sm:$0xf]
    %v1358 = vld [vmem:[%s7 + $0x1c] sm:$0xf]
    %v1359 = vpack.c.bf16 %v1349, %v1349
    %v1360 = vld [vmem:[%s8] sm:$0xf]
    %v1361 = vld [vmem:[%s8 + $0x4] sm:$0xf]
    %v1362 = vld [vmem:[%s8 + $0x8] sm:$0xf]
    %v1363 = vld [vmem:[%s8 + $0xc] sm:$0xf]
    %v1364 = vld [vmem:[%s8 + $0x10] sm:$0xf]
    %v1365 = vld [vmem:[%s8 + $0x14] sm:$0xf]
    %v1366 = vld [vmem:[%s8 + $0x18] sm:$0xf]
    %v1367 = vld [vmem:[%s8 + $0x1c] sm:$0xf]
    %v1376 = vunpack.c.l.b16 %v1360
    %v1377 = vunpack.c.l.b16 %v1361
    %v1378 = vunpack.c.l.b16 %v1362
    %v1379 = vunpack.c.l.b16 %v1363
    %v1380 = vunpack.c.l.b16 %v1364
    %v1381 = vunpack.c.l.b16 %v1365
    %v1382 = vunpack.c.l.b16 %v1366
    %v1383 = vunpack.c.l.b16 %v1367
    %v1384 = vpack.c.b16 %v1377, %v1376
    %v1385 = vpack.c.b16 %v1379, %v1378
    %v1386 = vpack.c.b16 %v1381, %v1380
    %v1387 = vpack.c.b16 %v1383, %v1382
    %v1393 = vsel %vm532, %v1359, 0
    %1395 = vmatprep.subr.bf16.mxu0 0
    %1396 = vmatpush1.bf16.msra.mxu0 %v1384
    %1397 = vmatprep.subr.bf16.mxu0 0
    %1398 = vmatpush1.bf16.msra.mxu0 %v1385
    %1399 = vmatprep.subr.bf16.mxu0 0
    %1400 = vmatpush1.bf16.msra.mxu0 %v1386
    %1401 = vmatprep.subr.bf16.mxu0 0
    %1402 = vmatpush1.bf16.msra.mxu0 %v1387
    %1403 = vmatprep.subr.bf16.mxu0 0
    %1404 = vmatpush1.bf16.msra.mxu0 0
    %1405 = vmatprep.subr.bf16.mxu0 0
    %1406 = vmatpush1.bf16.msra.mxu0 0
    %1407 = vmatprep.subr.bf16.mxu0 0
    %1408 = vmatpush1.bf16.msra.mxu0 0
    %1409 = vmatprep.subr.bf16.mxu0 0
    %1410 = vmatpush1.bf16.msra.mxu0 0
    %1411 = vmatprep.subr.bf16.mxu0 0
    %1412 = vmatpush1.bf16.msra.mxu0 0
    %1413 = vmatprep.subr.bf16.mxu0 0
    %1414 = vmatpush1.bf16.msra.mxu0 0
    %1415 = vmatprep.subr.bf16.mxu0 0
    %1416 = vmatpush1.bf16.msra.mxu0 0
    %1417 = vmatprep.subr.bf16.mxu0 0
    %1418 = vmatpush1.bf16.msra.mxu0 0
    %1419 = vmatprep.subr.bf16.mxu0 0
    %1420 = vmatpush1.bf16.msra.mxu0 0
    %1421 = vmatprep.subr.bf16.mxu0 0
    %1422 = vmatpush1.bf16.msra.mxu0 0
    %1423 = vmatprep.subr.bf16.mxu0 0
    %1424 = vmatpush1.bf16.msra.mxu0 0
    %1425 = vmatprep.subr.bf16.mxu0 0
    %1426 = vmatpush1.bf16.msra.mxu0 0
    %1427 = vmatprep.mubr.bf16.mxu0 0
    %1428 = vmatmul.mubr.bf16.gmra.mrb[0].mxu0 %v1393
    %v1429 = vpop.f32.mrb[0].mxu0
    %v1430 = vadd.f32 0.0, %v1429
    %v1431 = vpop.f32.mrb[0].mxu0
    %v1432 = vpop.f32.mrb[0].mxu0
    %v1433 = vpop.f32.mrb[0].mxu0
    %1434 = vdwg.mxu0
    %1436 = vrot.lane.b32.xlu0 %v1350, 64
    %v1437 = vpop.permute.xlu0 %1436
    %v1446 = vunpack.c.l.b16 %v1351
    %v1447 = vunpack.c.l.b16 %v1352
    %v1448 = vunpack.c.l.b16 %v1353
    %v1449 = vunpack.c.l.b16 %v1354
    %v1450 = vunpack.c.l.b16 %v1355
    %v1451 = vunpack.c.l.b16 %v1356
    %v1452 = vunpack.c.l.b16 %v1357
    %v1453 = vunpack.c.l.b16 %v1358
    %v1454 = vpack.c.b16 %v1447, %v1446
    %v1455 = vpack.c.b16 %v1449, %v1448
    %v1456 = vpack.c.b16 %v1451, %v1450
    %v1457 = vpack.c.b16 %v1453, %v1452
    %v1463 = vsel %vm532, %v1437, 0
    %1465 = vmatprep.subr.bf16.mxu0 0
    %1466 = vmatpush1.bf16.msra.mxu0 %v1454
    %1467 = vmatprep.subr.bf16.mxu0 0
    %1468 = vmatpush1.bf16.msra.mxu0 %v1455
    %1469 = vmatprep.subr.bf16.mxu0 0
    %1470 = vmatpush1.bf16.msra.mxu0 %v1456
    %1471 = vmatprep.subr.bf16.mxu0 0
    %1472 = vmatpush1.bf16.msra.mxu0 %v1457
    %1473 = vmatprep.subr.bf16.mxu0 0
    %1474 = vmatpush1.bf16.msra.mxu0 0
    %1475 = vmatprep.subr.bf16.mxu0 0
    %1476 = vmatpush1.bf16.msra.mxu0 0
    %1477 = vmatprep.subr.bf16.mxu0 0
    %1478 = vmatpush1.bf16.msra.mxu0 0
    %1479 = vmatprep.subr.bf16.mxu0 0
    %1480 = vmatpush1.bf16.msra.mxu0 0
    %1481 = vmatprep.subr.bf16.mxu0 0
    %1482 = vmatpush1.bf16.msra.mxu0 0
    %1483 = vmatprep.subr.bf16.mxu0 0
    %1484 = vmatpush1.bf16.msra.mxu0 0
    %1485 = vmatprep.subr.bf16.mxu0 0
    %1486 = vmatpush1.bf16.msra.mxu0 0
    %1487 = vmatprep.subr.bf16.mxu0 0
    %1488 = vmatpush1.bf16.msra.mxu0 0
    %1489 = vmatprep.subr.bf16.mxu0 0
    %1490 = vmatpush1.bf16.msra.mxu0 0
    %1491 = vmatprep.subr.bf16.mxu0 0
    %1492 = vmatpush1.bf16.msra.mxu0 0
    %1493 = vmatprep.subr.bf16.mxu0 0
    %1494 = vmatpush1.bf16.msra.mxu0 0
    %1495 = vmatprep.subr.bf16.mxu0 0
    %1496 = vmatpush1.bf16.msra.mxu0 0
    %1497 = vmatprep.mubr.bf16.mxu0 0
    %1498 = vmatmul.mubr.bf16.gmra.mrb[0].mxu0 %v1463
    %v1499 = vpop.f32.mrb[0].mxu0
    %v1500 = vadd.f32 %v1430, %v1499
    %v1501 = vpop.f32.mrb[0].mxu0
    %v1502 = vpop.f32.mrb[0].mxu0
    %v1503 = vpop.f32.mrb[0].mxu0
    %1504 = vdwg.mxu0
    %v1505 = vld [vmem:[%s9] sm:$0x1]
    %v1507 = vlaneseq
    %v1508 = vshrl.u32 %v1507, 7
    %v1509 = vsub.s32 0, %v1508
    %v1510 = vrot.slane %v1505, %v1509
    %v1512 = vadd.f32 %v1500, %v1510
    %vm1513 = vcmask 31744
    %v1514 = vsel %vm1513, %v1512, -inf
    %1515 = vmax.xlane.f32.xlu0 %v1514
    %v1516 = vpop.xlane.xlu0 %1515
    %v1517 = vsub.f32 %v1512, %v1516
    %v1518 = vmul.f32 %v1517, 1.442695
    %v1519 = vpow.pop %v1518
    %v1520 = vsel %vm1513, %v1519, 0.0
    %1521 = vadd.xlane.f32.xlu0 %v1520
    %v1522 = vpop.xlane.xlu0 %1521
    %v1523 = vlog2.pop %v1522
    %v1524 = vmul.f32 %v1523, 0.6931472
    %v1525 = vadd.f32 %v1516, %v1524
    %v1526 = vsub.f32 %v1516, %v1525
    %v1527 = vlaneseq
    %v1528 = vand.u32 %v1527, 127
    %v1529 = vcvt.s32.f32 %v1528
    %vm1530 = vcmp.eq.f32.partialorder %v1512, %v1516
    %v1531 = vsel %vm1530, %v1529, 4.0
    %v1532 = vsel %vm1513, %v1531, inf
    %1533 = vmin.xlane.f32.xlu0 %v1532
    %v1534 = vpop.xlane.xlu0 %1533
    %vm1535 = vcmp.eq.s32.totalorder %v1528, 0
    %vm1536 = vcmp.eq.s32.totalorder %v1528, 1
    %vm1537 = vcmp.eq.s32.totalorder %v1528, 2
    %v1538 = vsel %vm1537, %v1526, 0.0
    %v1539 = vsel %vm1536, %v1534, %v1538
    %1541 = vset.pattern.permute.xlu0 4
    %1542 = vperm.xlu0 %1541, %v1512
    %v1543 = vpop.permute.xlu0 %1542
    %v1545 = vsel %vm1535, %v1543, %v1539
    %1547 = vrot.lane.b32.xlu0 %v687, 64
    %v1548 = vpop.permute.xlu0 %1547
    %1550 = vst.msk [vmem:[%s10] sm:$0xff] %vm532, %v1548
    %1552 = vrot.lane.b32.xlu0 %v1545, 64
    %v1553 = vpop.permute.xlu0 %1552
    %vm1555 = vcmask 1048064
    %1556 = vst.msk [vmem:[%s10] sm:$0xff] %vm1555, %v1553
    // Predicated region
    $region50: #{iam_policy_act.1} parent=1 // pred_check
      _
    $region51: #{iam_policy_act.1} parent=1 // pred_check_branch
      %1558 = sbr.rel (0) target = $region53
    $region52: #{iam_policy_act.1} parent=1 // pred_region
      _
    $region53: #{iam_policy_act.1} parent=1 // pred_fallthru
      _
    // Predicated region
    $region54: #{iam_policy_act.1} parent=1 // pred_check
      _
    $region55: #{iam_policy_act.1} parent=1 // pred_check_branch
      %1560 = sbr.rel (0) target = $region57
    $region56: #{iam_policy_act.1} parent=1 // pred_region
      _
    $region57: #{iam_policy_act.1} parent=1 // pred_fallthru
      _
    %1561 = vsyncpa [#allocation3], 1
    %1562 = vsyncpa [#allocation5], 1

</llo_original>
